<compile_context>
chip_gen: v7x
topology: tpu7x:2x2x1
jax: 0.10.0
libtpu: 0.0.40
codegen_flags: <defaults>
</compile_context>

<pallas_src>
import functools

import jax
import jax.numpy as jnp
from jax.experimental import pallas as pl
from jax.experimental.pallas import tpu as pltpu


def _round_up(n, m):
    return (n + m - 1) // m * m


def _decoder_kernel(x_ref, w1_ref, c1_ref, w2_ref, c2_ref, w3_ref, c3_ref,
                    o_ref):
    # ---- Linear(D,1024) + folded BN + ReLU (bf16 MXU inputs, f32 accum) ----
    h1 = jnp.dot(x_ref[...].astype(jnp.bfloat16), w1_ref[...],
                 preferred_element_type=jnp.float32)
    h1 = jnp.maximum(h1 + c1_ref[...], 0.0)

    # ---- Linear(1024,512) + folded BN + ReLU ----
    h2 = jnp.dot(h1.astype(jnp.bfloat16), w2_ref[...],
                 preferred_element_type=jnp.float32)
    h2 = jnp.maximum(h2 + c2_ref[...], 0.0)

    # ---- Linear(512,128-padded) + Sigmoid, lane-dense 128-wide store ----
    h3 = jnp.dot(h2.astype(jnp.bfloat16), w3_ref[...],
                 preferred_element_type=jnp.float32) + c3_ref[...]
    o_ref[...] = jax.nn.sigmoid(h3)


@functools.partial(jax.jit, static_argnames=("out_dim", "block_b"))
def dense_decoder(x, fused_params, *, out_dim=65, block_b=256):
    """x: (B, D) float32. fused_params from fold_params(). Returns (B, out_dim)."""
    w1, c1, w2, c2, w3, c3 = fused_params
    B, D = x.shape
    H1, H2, OUTP = w1.shape[1], w2.shape[1], w3.shape[1]

    # Batch tile: whole (sublane-padded) batch if small, else block_b rows.
    bb = min(block_b, _round_up(B, 8))
    Bp = _round_up(B, bb)
    if Bp != B:
        x = jnp.pad(x, ((0, Bp - B), (0, 0)))

    full = lambda i: (0, 0)

    cost = pl.CostEstimate(
        flops=2 * Bp * (D * H1 + H1 * H2 + H2 * OUTP),
        transcendentals=Bp * OUTP,
        bytes_accessed=(Bp * D * 4 + Bp * OUTP * 4
                        + (w1.size + w2.size + w3.size) * 2
                        + (c1.size + c2.size + c3.size) * 4),
    )

    out = pl.pallas_call(
        _decoder_kernel,
        out_shape=jax.ShapeDtypeStruct((Bp, OUTP), jnp.float32),
        grid_spec=pltpu.PrefetchScalarGridSpec(
            num_scalar_prefetch=0,
            grid=(Bp // bb,),
            in_specs=[
                pl.BlockSpec((bb, D), lambda i: (i, 0)),   # x  (batch-tiled)
                pl.BlockSpec((D, H1), full),               # W1 (BN1-folded, bf16)
                pl.BlockSpec((1, H1), full),               # c1 = b1*s1 + t1
                pl.BlockSpec((H1, H2), full),              # W2 (BN2-folded, bf16)
                pl.BlockSpec((1, H2), full),               # c2 = b2*s2 + t2
                pl.BlockSpec((H2, OUTP), full),            # W3 (bf16, 65->128 padded)
                pl.BlockSpec((1, OUTP), full),             # b3 (padded)
                # NOTE: on v7x the resident weight operands could additionally
                # use pipeline_mode=pl.Buffered(1) to save VMEM; omitted for
                # portability across jax versions.
            ],
            out_specs=pl.BlockSpec((bb, OUTP), lambda i: (i, 0)),
        ),
        compiler_params=pltpu.CompilerParams(
            dimension_semantics=("parallel",),
            vmem_limit_bytes=48 << 20,
        ),
        cost_estimate=cost,
    )(x, w1, c1, w2, c2, w3, c3)

    return out[:B, :out_dim]


def make_params(key, input_dim, h1=1024, h2=512, out=65):
    """Raw PyTorch-style params: Linear weights/biases + BatchNorm stats."""
    ks = jax.random.split(key, 14)

    def linear(kw, kb, fan_in, fan_out):
        bound = 1.0 / jnp.sqrt(fan_in)
        w = jax.random.uniform(kw, (fan_in, fan_out), jnp.float32, -bound, bound)
        b = jax.random.uniform(kb, (fan_out,), jnp.float32, -bound, bound)
        return w, b

    w1, b1 = linear(ks[0], ks[1], input_dim, h1)
    w2, b2 = linear(ks[2], ks[3], h1, h2)
    w3, b3 = linear(ks[4], ks[5], h2, out)

    g1 = 1.0 + 0.1 * jax.random.normal(ks[6], (h1,), jnp.float32)
    be1 = 0.05 * jax.random.normal(ks[7], (h1,), jnp.float32)
    rm1 = 0.02 * jax.random.normal(ks[8], (h1,), jnp.float32)
    rv1 = 1.0 + 0.1 * jax.random.uniform(ks[9], (h1,), jnp.float32)

    g2 = 1.0 + 0.1 * jax.random.normal(ks[10], (h2,), jnp.float32)
    be2 = 0.05 * jax.random.normal(ks[11], (h2,), jnp.float32)
    rm2 = 0.02 * jax.random.normal(ks[12], (h2,), jnp.float32)
    rv2 = 1.0 + 0.1 * jax.random.uniform(ks[13], (h2,), jnp.float32)

    return (w1, b1, g1, be1, rm1, rv1,
            w2, b2, g2, be2, rm2, rv2,
            w3, b3)


def fold_params(raw, eps=1e-5, lane_pad=128):
    """Fold BN into Linear, cast weights to bf16, pad last layer to 128 lanes."""
    (w1, b1, g1, be1, rm1, rv1,
     w2, b2, g2, be2, rm2, rv2,
     w3, b3) = raw

    s1 = g1 / jnp.sqrt(rv1 + eps)
    t1 = be1 - rm1 * s1
    s2 = g2 / jnp.sqrt(rv2 + eps)
    t2 = be2 - rm2 * s2

    w1f = (w1 * s1[None, :]).astype(jnp.bfloat16)
    c1 = (b1 * s1 + t1)[None, :].astype(jnp.float32)
    w2f = (w2 * s2[None, :]).astype(jnp.bfloat16)
    c2 = (b2 * s2 + t2)[None, :].astype(jnp.float32)

    out = w3.shape[1]
    outp = _round_up(out, lane_pad)
    w3f = jnp.pad(w3, ((0, 0), (0, outp - out))).astype(jnp.bfloat16)
    c3 = jnp.pad(b3, (0, outp - out))[None, :].astype(jnp.float32)

    return (w1f, c1, w2f, c2, w3f, c3)


def reference_matched(x, fused, out_dim=65):
    """Pure-JAX reference with the same precision policy as the kernel."""
    w1, c1, w2, c2, w3, c3 = fused
    h = jnp.maximum(jnp.dot(x.astype(jnp.bfloat16), w1,
                            preferred_element_type=jnp.float32) + c1, 0.0)
    h = jnp.maximum(jnp.dot(h.astype(jnp.bfloat16), w2,
                            preferred_element_type=jnp.float32) + c2, 0.0)
    y = jax.nn.sigmoid(jnp.dot(h.astype(jnp.bfloat16), w3,
                               preferred_element_type=jnp.float32) + c3)
    return y[:, :out_dim]


def reference_f32(x, raw, eps=1e-5):
    """Full-precision reference following the original module (eval mode)."""
    (w1, b1, g1, be1, rm1, rv1,
     w2, b2, g2, be2, rm2, rv2,
     w3, b3) = raw
    h = x @ w1 + b1
    h = (h - rm1) / jnp.sqrt(rv1 + eps) * g1 + be1
    h = jnp.maximum(h, 0.0)
    h = h @ w2 + b2
    h = (h - rm2) / jnp.sqrt(rv2 + eps) * g2 + be2
    h = jnp.maximum(h, 0.0)
    return jax.nn.sigmoid(h @ w3 + b3)


if __name__ == "__main__":
    INPUT_DIM = 256
    BATCH = 6  # not a multiple of 8 -> exercises the pad + slice path

    key = jax.random.PRNGKey(0)
    k_x, k_p = jax.random.split(key)
    x = jax.random.normal(k_x, (BATCH, INPUT_DIM), jnp.float32)

    raw = make_params(k_p, INPUT_DIM)
    fused = fold_params(raw)

    out = dense_decoder(x, fused)
    out = jax.block_until_ready(out)
    assert out.shape == (BATCH, 65)

    ref_m = reference_matched(x, fused, out_dim=65)
    assert jnp.allclose(out, ref_m, atol=2e-3, rtol=2e-3), \
        "mismatch vs precision-matched (bf16) reference"

    ref_f = reference_f32(x, raw)
    assert jnp.allclose(out, ref_f, atol=3e-2, rtol=3e-2), \
        "mismatch vs f32 reference"

    print("KERNEL_OK")
</pallas_src>

<mosaic_0001>
module attributes {stable_mosaic.version = 11 : i64} {
  func.func @_decoder_kernel(%arg0: i32, %arg1: memref<8x256xf32, #tpu.memory_space<vmem>>, %arg2: memref<256x1024xbf16, #tpu.memory_space<vmem>>, %arg3: memref<1x1024xf32, #tpu.memory_space<vmem>>, %arg4: memref<1024x512xbf16, #tpu.memory_space<vmem>>, %arg5: memref<1x512xf32, #tpu.memory_space<vmem>>, %arg6: memref<512x128xbf16, #tpu.memory_space<vmem>>, %arg7: memref<1x128xf32, #tpu.memory_space<vmem>>, %arg8: memref<8x128xf32, #tpu.memory_space<vmem>>) attributes {dimension_semantics = [#tpu.dimension_semantics<parallel>], iteration_bounds = array<i64: 1>, scalar_prefetch = 0 : i64, scratch_operands = 0 : i64, tpu.core_type = #tpu.core_type<tc>, window_params = [{transform_indices = @transform_0, window_bounds = array<i64: 8, 256>}, {pipeline_mode = #tpu.pipeline_mode<synchronous>, transform_indices = @transform_1, window_bounds = array<i64: 256, 1024>}, {pipeline_mode = #tpu.pipeline_mode<synchronous>, transform_indices = @transform_2, window_bounds = array<i64: 1, 1024>}, {pipeline_mode = #tpu.pipeline_mode<synchronous>, transform_indices = @transform_3, window_bounds = array<i64: 1024, 512>}, {pipeline_mode = #tpu.pipeline_mode<synchronous>, transform_indices = @transform_4, window_bounds = array<i64: 1, 512>}, {pipeline_mode = #tpu.pipeline_mode<synchronous>, transform_indices = @transform_5, window_bounds = array<i64: 512, 128>}, {pipeline_mode = #tpu.pipeline_mode<synchronous>, transform_indices = @transform_6, window_bounds = array<i64: 1, 128>}, {transform_indices = @transform_7, window_bounds = array<i64: 8, 128>}]} {
    %c0 = arith.constant 0 : index
    %c0_0 = arith.constant 0 : index
    %0 = vector.load %arg1[%c0, %c0_0] : memref<8x256xf32, #tpu.memory_space<vmem>>, vector<8x256xf32>
    %1 = arith.truncf %0 : vector<8x256xf32> to vector<8x256xbf16>
    %c0_1 = arith.constant 0 : index
    %c0_2 = arith.constant 0 : index
    %2 = vector.load %arg2[%c0_1, %c0_2] : memref<256x1024xbf16, #tpu.memory_space<vmem>>, vector<256x1024xbf16>
    %cst = arith.constant dense<0.000000e+00> : vector<8x1024xf32>
    %3 = tpu.matmul %1, %2, %cst {dimension_numbers = #tpu.dot_dimension_numbers<[1], [0], [0], [1], [0, 0, 1, 1], [], []>} : vector<8x256xbf16>, vector<256x1024xbf16>, vector<8x1024xf32> -> vector<8x1024xf32>
    %c0_3 = arith.constant 0 : index
    %c0_4 = arith.constant 0 : index
    %4 = vector.load %arg3[%c0_3, %c0_4] : memref<1x1024xf32, #tpu.memory_space<vmem>>, vector<1x1024xf32>
    %5 = vector.broadcast %4 : vector<1x1024xf32> to vector<8x1024xf32>
    %6 = arith.addf %3, %5 : vector<8x1024xf32>
    %cst_5 = arith.constant 0.000000e+00 : f32
    %7 = vector.broadcast %cst_5 : f32 to vector<8x1024xf32>
    %8 = arith.maximumf %6, %7 : vector<8x1024xf32>
    %9 = arith.truncf %8 : vector<8x1024xf32> to vector<8x1024xbf16>
    %c0_6 = arith.constant 0 : index
    %c0_7 = arith.constant 0 : index
    %10 = vector.load %arg4[%c0_6, %c0_7] : memref<1024x512xbf16, #tpu.memory_space<vmem>>, vector<1024x512xbf16>
    %cst_8 = arith.constant dense<0.000000e+00> : vector<8x512xf32>
    %11 = tpu.matmul %9, %10, %cst_8 {dimension_numbers = #tpu.dot_dimension_numbers<[1], [0], [0], [1], [0, 0, 1, 1], [], []>} : vector<8x1024xbf16>, vector<1024x512xbf16>, vector<8x512xf32> -> vector<8x512xf32>
    %c0_9 = arith.constant 0 : index
    %c0_10 = arith.constant 0 : index
    %12 = vector.load %arg5[%c0_9, %c0_10] : memref<1x512xf32, #tpu.memory_space<vmem>>, vector<1x512xf32>
    %13 = vector.broadcast %12 : vector<1x512xf32> to vector<8x512xf32>
    %14 = arith.addf %11, %13 : vector<8x512xf32>
    %cst_11 = arith.constant 0.000000e+00 : f32
    %15 = vector.broadcast %cst_11 : f32 to vector<8x512xf32>
    %16 = arith.maximumf %14, %15 : vector<8x512xf32>
    %17 = arith.truncf %16 : vector<8x512xf32> to vector<8x512xbf16>
    %c0_12 = arith.constant 0 : index
    %c0_13 = arith.constant 0 : index
    %18 = vector.load %arg6[%c0_12, %c0_13] : memref<512x128xbf16, #tpu.memory_space<vmem>>, vector<512x128xbf16>
    %cst_14 = arith.constant dense<0.000000e+00> : vector<8x128xf32>
    %19 = tpu.matmul %17, %18, %cst_14 {dimension_numbers = #tpu.dot_dimension_numbers<[1], [0], [0], [1], [0, 0, 1, 1], [], []>} : vector<8x512xbf16>, vector<512x128xbf16>, vector<8x128xf32> -> vector<8x128xf32>
    %c0_15 = arith.constant 0 : index
    %c0_16 = arith.constant 0 : index
    %20 = vector.load %arg7[%c0_15, %c0_16] : memref<1x128xf32, #tpu.memory_space<vmem>>, vector<1x128xf32>
    %21 = vector.broadcast %20 : vector<1x128xf32> to vector<8x128xf32>
    %22 = arith.addf %19, %21 : vector<8x128xf32>
    %23 = arith.negf %22 : vector<8x128xf32>
    %24 = math.exp %23 : vector<8x128xf32>
    %cst_17 = arith.constant 1.000000e+00 : f32
    %25 = vector.broadcast %cst_17 : f32 to vector<8x128xf32>
    %26 = arith.addf %25, %24 : vector<8x128xf32>
    %27 = arith.divf %25, %26 : vector<8x128xf32>
    %c0_18 = arith.constant 0 : index
    %c0_19 = arith.constant 0 : index
    %28 = vector.load %arg8[%c0_18, %c0_19] : memref<8x128xf32, #tpu.memory_space<vmem>>, vector<8x128xf32>
    tpu.vector_store %arg8[%c0_18, %c0_19], %27 {strides = array<i32>} : memref<8x128xf32, #tpu.memory_space<vmem>>, vector<8x128xf32>,
    return
  }
  func.func @transform_0(%arg0: i32) -> (i32, i32) {
    %c0_i32 = arith.constant 0 : i32
    %c0_i32_0 = arith.constant 0 : i32
    return %arg0, %c0_i32 : i32, i32
  }
  func.func @transform_1(%arg0: i32) -> (i32, i32) {
    %c0_i32 = arith.constant 0 : i32
    %c0_i32_0 = arith.constant 0 : i32
    %c0_i32_1 = arith.constant 0 : i32
    return %c0_i32, %c0_i32_0 : i32, i32
  }
  func.func @transform_2(%arg0: i32) -> (i32, i32) {
    %c0_i32 = arith.constant 0 : i32
    %c0_i32_0 = arith.constant 0 : i32
    %c0_i32_1 = arith.constant 0 : i32
    return %c0_i32, %c0_i32_0 : i32, i32
  }
  func.func @transform_3(%arg0: i32) -> (i32, i32) {
    %c0_i32 = arith.constant 0 : i32
    %c0_i32_0 = arith.constant 0 : i32
    %c0_i32_1 = arith.constant 0 : i32
    return %c0_i32, %c0_i32_0 : i32, i32
  }
  func.func @transform_4(%arg0: i32) -> (i32, i32) {
    %c0_i32 = arith.constant 0 : i32
    %c0_i32_0 = arith.constant 0 : i32
    %c0_i32_1 = arith.constant 0 : i32
    return %c0_i32, %c0_i32_0 : i32, i32
  }
  func.func @transform_5(%arg0: i32) -> (i32, i32) {
    %c0_i32 = arith.constant 0 : i32
    %c0_i32_0 = arith.constant 0 : i32
    %c0_i32_1 = arith.constant 0 : i32
    return %c0_i32, %c0_i32_0 : i32, i32
  }
  func.func @transform_6(%arg0: i32) -> (i32, i32) {
    %c0_i32 = arith.constant 0 : i32
    %c0_i32_0 = arith.constant 0 : i32
    %c0_i32_1 = arith.constant 0 : i32
    return %c0_i32, %c0_i32_0 : i32, i32
  }
  func.func @transform_7(%arg0: i32) -> (i32, i32) {
    %c0_i32 = arith.constant 0 : i32
    %c0_i32_0 = arith.constant 0 : i32
    return %arg0, %c0_i32 : i32, i32
  }
}

</mosaic_0001>

<llo_original>
// kernel: dense_decoder.1
$region0: #{dense_decoder.1}
  #allocation0 [shape = 'u32[]', space=smem, size = 0x4, offset = 0x4, fixed_abs, tag = 'smem constant byte address 0x4 - core index']
  #allocation1 [shape = 'u32[144,128]{1,0:T(1,128)}', space=vmem, size = 0x12000, scoped, tag = 'internal scratch']
  %s0 = inlined_call_operand.vmem [shape: f32[8,256], index: 0, kind: input, shape index: {}]
  %s1 = inlined_call_operand.hbm [shape: bf16[256,1024], index: 1, kind: input, shape index: {}]
  %s2 = inlined_call_operand.vmem [shape: f32[1,1024], index: 2, kind: input, shape index: {}]
  %s3 = inlined_call_operand.hbm [shape: bf16[1024,512], index: 3, kind: input, shape index: {}]
  %s4 = inlined_call_operand.vmem [shape: f32[1,512], index: 4, kind: input, shape index: {}]
  %s5 = inlined_call_operand.hbm [shape: bf16[512,128], index: 5, kind: input, shape index: {}]
  %s6 = inlined_call_operand.vmem [shape: f32[1,128], index: 6, kind: input, shape index: {}]
  %s7 = inlined_call_operand.hbm [shape: f32[8,128], index: 7, kind: output, shape index: {}]
  %s8 = sld [smem:[#allocation0]]
  $region50: #{dense_decoder.1} parent=0
    _
  %s10 = ssub.s32 1, %s8
  %s11 = scalar_select 0, %s10, %s8
  $region1: #{dense_decoder.1} parent=0
    #allocation2 [shape = 'u8[524288]{0}', space=vmem, size = 0x80000, scoped, tag = 'input window, operand 1, single buffered']
    #allocation3 [shape = 's32[1]{0}', space=sflag, size = 0x4, scoped, tag = 'scoped memory for dense_decoder.1']
    #allocation4 [shape = 's32[1]{0}', space=sflag, size = 0x4, scoped, tag = 'scoped memory for dense_decoder.1']
    #allocation5 [shape = 'u8[1048576]{0}', space=vmem, size = 0x100000, scoped, tag = 'input window, operand 3, single buffered']
    #allocation6 [shape = 's32[1]{0}', space=sflag, size = 0x4, scoped, tag = 'scoped memory for dense_decoder.1']
    #allocation7 [shape = 'u8[131072]{0}', space=vmem, size = 0x20000, scoped, tag = 'input window, operand 5, single buffered']
    #allocation8 [shape = 'u8[4096]{0}', space=vmem, size = 0x1000, scoped, tag = 'output window, operand 0, single buffered']
    %12 = vsyncpa [#allocation3], 0
    %13 = vsyncpa [#allocation6], 0
    %14 = vsyncpa [#allocation4], 0
    // Predicated region
    $region2: #{dense_decoder.1} parent=1 // pred_check
      _
    $region3: #{dense_decoder.1} parent=1 // pred_check_branch
      %16 = sbr.rel (0) target = $region5
    $region4: #{dense_decoder.1} parent=1 // pred_region
      _
    $region5: #{dense_decoder.1} parent=1 // pred_fallthru
      _
    // Predicated region
    $region6: #{dense_decoder.1} parent=1 // pred_check
      _
    $region7: #{dense_decoder.1} parent=1 // pred_check_branch
      %18 = sbr.rel (0) target = $region9
    $region8: #{dense_decoder.1} parent=1 // pred_region
      %s20 = ssub.s32 16384, 16384
      %21 = vsyncadd [#allocation3], %s20
      %s22 = sshll.u32 [#allocation2], 4
      %s23 = int_to_ptr.vmem [resolvable:$true] %s22
      %28 = dma.hbm_to_vmem [thread:$0]  %s1, 16384, %s23, [#allocation3], 512, 512, 32
    $region9: #{dense_decoder.1} parent=1 // pred_fallthru
      _
    // Predicated region
    $region10: #{dense_decoder.1} parent=1 // pred_check
      _
    $region11: #{dense_decoder.1} parent=1 // pred_check_branch
      %30 = sbr.rel (0) target = $region13
    $region12: #{dense_decoder.1} parent=1 // pred_region
      _
    $region13: #{dense_decoder.1} parent=1 // pred_fallthru
      _
    // Predicated region
    $region14: #{dense_decoder.1} parent=1 // pred_check
      _
    $region15: #{dense_decoder.1} parent=1 // pred_check_branch
      %32 = sbr.rel (0) target = $region17
    $region16: #{dense_decoder.1} parent=1 // pred_region
      %s34 = ssub.s32 32768, 32768
      %35 = vsyncadd [#allocation6], %s34
      %s36 = sshll.u32 [#allocation5], 4
      %s37 = int_to_ptr.vmem [resolvable:$true] %s36
      %42 = dma.hbm_to_vmem [thread:$0]  %s3, 32768, %s37, [#allocation6], 256, 256, 16
    $region17: #{dense_decoder.1} parent=1 // pred_fallthru
      _
    // Predicated region
    $region18: #{dense_decoder.1} parent=1 // pred_check
      _
    $region19: #{dense_decoder.1} parent=1 // pred_check_branch
      %44 = sbr.rel (0) target = $region21
    $region20: #{dense_decoder.1} parent=1 // pred_region
      _
    $region21: #{dense_decoder.1} parent=1 // pred_fallthru
      _
    // Predicated region
    $region22: #{dense_decoder.1} parent=1 // pred_check
      _
    $region23: #{dense_decoder.1} parent=1 // pred_check_branch
      %46 = sbr.rel (0) target = $region25
    $region24: #{dense_decoder.1} parent=1 // pred_region
      %s48 = ssub.s32 4096, 4096
      %49 = vsyncadd [#allocation6], %s48
      %s50 = sshll.u32 [#allocation7], 4
      %s51 = int_to_ptr.vmem [resolvable:$true] %s50
      %56 = dma.hbm_to_vmem [thread:$0]  %s5, 4096, %s51, [#allocation6], 64, 64, 4
    $region25: #{dense_decoder.1} parent=1 // pred_fallthru
      _
    // Predicated region
    $region26: #{dense_decoder.1} parent=1 // pred_check
      _
    $region27: #{dense_decoder.1} parent=1 // pred_check_branch
      %58 = sbr.rel (0) target = $region29
    $region28: #{dense_decoder.1} parent=1 // pred_region
      _
    $region29: #{dense_decoder.1} parent=1 // pred_fallthru
      _
    // Predicated region
    $region30: #{dense_decoder.1} parent=1 // pred_check
      _
    $region31: #{dense_decoder.1} parent=1 // pred_check_branch
      %60 = sbr.rel (0) target = $region33
    $region32: #{dense_decoder.1} parent=1 // pred_region
      %61 = dma.done [#allocation3], 16384
    $region33: #{dense_decoder.1} parent=1 // pred_fallthru
      _
    // Predicated region
    $region34: #{dense_decoder.1} parent=1 // pred_check
      _
    $region35: #{dense_decoder.1} parent=1 // pred_check_branch
      %63 = sbr.rel (0) target = $region37
    $region36: #{dense_decoder.1} parent=1 // pred_region
      %64 = dma.done [#allocation6], 32768
    $region37: #{dense_decoder.1} parent=1 // pred_fallthru
      _
    // Predicated region
    $region38: #{dense_decoder.1} parent=1 // pred_check
      _
    $region39: #{dense_decoder.1} parent=1 // pred_check_branch
      %66 = sbr.rel (0) target = $region41
    $region40: #{dense_decoder.1} parent=1 // pred_region
      %67 = dma.done [#allocation6], 4096
    $region41: #{dense_decoder.1} parent=1 // pred_fallthru
      _
    %v69 = vld [vmem:[%s0] sm:$0xff]
    %v70 = vld [vmem:[%s0 + $0x8] sm:$0xff]
    %v71 = vpack.c.bf16 %v69, %v69
    %v72 = vpack.c.bf16 %v70, %v70
    %v73 = vld [vmem:[#allocation2] sm:$0xff]
    %v74 = vld [vmem:[#allocation2 + $0x8] sm:$0xff]
    %v75 = vld [vmem:[#allocation2 + $0x10] sm:$0xff]
    %v76 = vld [vmem:[#allocation2 + $0x18] sm:$0xff]
    %v77 = vld [vmem:[#allocation2 + $0x20] sm:$0xff]
    %v78 = vld [vmem:[#allocation2 + $0x28] sm:$0xff]
    %v79 = vld [vmem:[#allocation2 + $0x30] sm:$0xff]
    %v80 = vld [vmem:[#allocation2 + $0x38] sm:$0xff]
    %v81 = vld [vmem:[#allocation2 + $0x40] sm:$0xff]
    %v82 = vld [vmem:[#allocation2 + $0x48] sm:$0xff]
    %v83 = vld [vmem:[#allocation2 + $0x50] sm:$0xff]
    %v84 = vld [vmem:[#allocation2 + $0x58] sm:$0xff]
    %v85 = vld [vmem:[#allocation2 + $0x60] sm:$0xff]
    %v86 = vld [vmem:[#allocation2 + $0x68] sm:$0xff]
    %v87 = vld [vmem:[#allocation2 + $0x70] sm:$0xff]
    %v88 = vld [vmem:[#allocation2 + $0x78] sm:$0xff]
    %v89 = vld [vmem:[#allocation2 + $0x80] sm:$0xff]
    %v90 = vld [vmem:[#allocation2 + $0x88] sm:$0xff]
    %v91 = vld [vmem:[#allocation2 + $0x90] sm:$0xff]
    %v92 = vld [vmem:[#allocation2 + $0x98] sm:$0xff]
    %v93 = vld [vmem:[#allocation2 + $0xa0] sm:$0xff]
    %v94 = vld [vmem:[#allocation2 + $0xa8] sm:$0xff]
    %v95 = vld [vmem:[#allocation2 + $0xb0] sm:$0xff]
    %v96 = vld [vmem:[#allocation2 + $0xb8] sm:$0xff]
    %v97 = vld [vmem:[#allocation2 + $0xc0] sm:$0xff]
    %v98 = vld [vmem:[#allocation2 + $0xc8] sm:$0xff]
    %v99 = vld [vmem:[#allocation2 + $0xd0] sm:$0xff]
    %v100 = vld [vmem:[#allocation2 + $0xd8] sm:$0xff]
    %v101 = vld [vmem:[#allocation2 + $0xe0] sm:$0xff]
    %v102 = vld [vmem:[#allocation2 + $0xe8] sm:$0xff]
    %v103 = vld [vmem:[#allocation2 + $0xf0] sm:$0xff]
    %v104 = vld [vmem:[#allocation2 + $0xf8] sm:$0xff]
    %v105 = vld [vmem:[#allocation2 + $0x100] sm:$0xff]
    %v106 = vld [vmem:[#allocation2 + $0x108] sm:$0xff]
    %v107 = vld [vmem:[#allocation2 + $0x110] sm:$0xff]
    %v108 = vld [vmem:[#allocation2 + $0x118] sm:$0xff]
    %v109 = vld [vmem:[#allocation2 + $0x120] sm:$0xff]
    %v110 = vld [vmem:[#allocation2 + $0x128] sm:$0xff]
    %v111 = vld [vmem:[#allocation2 + $0x130] sm:$0xff]
    %v112 = vld [vmem:[#allocation2 + $0x138] sm:$0xff]
    %v113 = vld [vmem:[#allocation2 + $0x140] sm:$0xff]
    %v114 = vld [vmem:[#allocation2 + $0x148] sm:$0xff]
    %v115 = vld [vmem:[#allocation2 + $0x150] sm:$0xff]
    %v116 = vld [vmem:[#allocation2 + $0x158] sm:$0xff]
    %v117 = vld [vmem:[#allocation2 + $0x160] sm:$0xff]
    %v118 = vld [vmem:[#allocation2 + $0x168] sm:$0xff]
    %v119 = vld [vmem:[#allocation2 + $0x170] sm:$0xff]
    %v120 = vld [vmem:[#allocation2 + $0x178] sm:$0xff]
    %v121 = vld [vmem:[#allocation2 + $0x180] sm:$0xff]
    %v122 = vld [vmem:[#allocation2 + $0x188] sm:$0xff]
    %v123 = vld [vmem:[#allocation2 + $0x190] sm:$0xff]
    %v124 = vld [vmem:[#allocation2 + $0x198] sm:$0xff]
    %v125 = vld [vmem:[#allocation2 + $0x1a0] sm:$0xff]
    %v126 = vld [vmem:[#allocation2 + $0x1a8] sm:$0xff]
    %v127 = vld [vmem:[#allocation2 + $0x1b0] sm:$0xff]
    %v128 = vld [vmem:[#allocation2 + $0x1b8] sm:$0xff]
    %v129 = vld [vmem:[#allocation2 + $0x1c0] sm:$0xff]
    %v130 = vld [vmem:[#allocation2 + $0x1c8] sm:$0xff]
    %v131 = vld [vmem:[#allocation2 + $0x1d0] sm:$0xff]
    %v132 = vld [vmem:[#allocation2 + $0x1d8] sm:$0xff]
    %v133 = vld [vmem:[#allocation2 + $0x1e0] sm:$0xff]
    %v134 = vld [vmem:[#allocation2 + $0x1e8] sm:$0xff]
    %v135 = vld [vmem:[#allocation2 + $0x1f0] sm:$0xff]
    %v136 = vld [vmem:[#allocation2 + $0x1f8] sm:$0xff]
    %v137 = vld [vmem:[#allocation2 + $0x200] sm:$0xff]
    %v138 = vld [vmem:[#allocation2 + $0x208] sm:$0xff]
    %v139 = vld [vmem:[#allocation2 + $0x210] sm:$0xff]
    %v140 = vld [vmem:[#allocation2 + $0x218] sm:$0xff]
    %v141 = vld [vmem:[#allocation2 + $0x220] sm:$0xff]
    %v142 = vld [vmem:[#allocation2 + $0x228] sm:$0xff]
    %v143 = vld [vmem:[#allocation2 + $0x230] sm:$0xff]
    %v144 = vld [vmem:[#allocation2 + $0x238] sm:$0xff]
    %v145 = vld [vmem:[#allocation2 + $0x240] sm:$0xff]
    %v146 = vld [vmem:[#allocation2 + $0x248] sm:$0xff]
    %v147 = vld [vmem:[#allocation2 + $0x250] sm:$0xff]
    %v148 = vld [vmem:[#allocation2 + $0x258] sm:$0xff]
    %v149 = vld [vmem:[#allocation2 + $0x260] sm:$0xff]
    %v150 = vld [vmem:[#allocation2 + $0x268] sm:$0xff]
    %v151 = vld [vmem:[#allocation2 + $0x270] sm:$0xff]
    %v152 = vld [vmem:[#allocation2 + $0x278] sm:$0xff]
    %v153 = vld [vmem:[#allocation2 + $0x280] sm:$0xff]
    %v154 = vld [vmem:[#allocation2 + $0x288] sm:$0xff]
    %v155 = vld [vmem:[#allocation2 + $0x290] sm:$0xff]
    %v156 = vld [vmem:[#allocation2 + $0x298] sm:$0xff]
    %v157 = vld [vmem:[#allocation2 + $0x2a0] sm:$0xff]
    %v158 = vld [vmem:[#allocation2 + $0x2a8] sm:$0xff]
    %v159 = vld [vmem:[#allocation2 + $0x2b0] sm:$0xff]
    %v160 = vld [vmem:[#allocation2 + $0x2b8] sm:$0xff]
    %v161 = vld [vmem:[#allocation2 + $0x2c0] sm:$0xff]
    %v162 = vld [vmem:[#allocation2 + $0x2c8] sm:$0xff]
    %v163 = vld [vmem:[#allocation2 + $0x2d0] sm:$0xff]
    %v164 = vld [vmem:[#allocation2 + $0x2d8] sm:$0xff]
    %v165 = vld [vmem:[#allocation2 + $0x2e0] sm:$0xff]
    %v166 = vld [vmem:[#allocation2 + $0x2e8] sm:$0xff]
    %v167 = vld [vmem:[#allocation2 + $0x2f0] sm:$0xff]
    %v168 = vld [vmem:[#allocation2 + $0x2f8] sm:$0xff]
    %v169 = vld [vmem:[#allocation2 + $0x300] sm:$0xff]
    %v170 = vld [vmem:[#allocation2 + $0x308] sm:$0xff]
    %v171 = vld [vmem:[#allocation2 + $0x310] sm:$0xff]
    %v172 = vld [vmem:[#allocation2 + $0x318] sm:$0xff]
    %v173 = vld [vmem:[#allocation2 + $0x320] sm:$0xff]
    %v174 = vld [vmem:[#allocation2 + $0x328] sm:$0xff]
    %v175 = vld [vmem:[#allocation2 + $0x330] sm:$0xff]
    %v176 = vld [vmem:[#allocation2 + $0x338] sm:$0xff]
    %v177 = vld [vmem:[#allocation2 + $0x340] sm:$0xff]
    %v178 = vld [vmem:[#allocation2 + $0x348] sm:$0xff]
    %v179 = vld [vmem:[#allocation2 + $0x350] sm:$0xff]
    %v180 = vld [vmem:[#allocation2 + $0x358] sm:$0xff]
    %v181 = vld [vmem:[#allocation2 + $0x360] sm:$0xff]
    %v182 = vld [vmem:[#allocation2 + $0x368] sm:$0xff]
    %v183 = vld [vmem:[#allocation2 + $0x370] sm:$0xff]
    %v184 = vld [vmem:[#allocation2 + $0x378] sm:$0xff]
    %v185 = vld [vmem:[#allocation2 + $0x380] sm:$0xff]
    %v186 = vld [vmem:[#allocation2 + $0x388] sm:$0xff]
    %v187 = vld [vmem:[#allocation2 + $0x390] sm:$0xff]
    %v188 = vld [vmem:[#allocation2 + $0x398] sm:$0xff]
    %v189 = vld [vmem:[#allocation2 + $0x3a0] sm:$0xff]
    %v190 = vld [vmem:[#allocation2 + $0x3a8] sm:$0xff]
    %v191 = vld [vmem:[#allocation2 + $0x3b0] sm:$0xff]
    %v192 = vld [vmem:[#allocation2 + $0x3b8] sm:$0xff]
    %v193 = vld [vmem:[#allocation2 + $0x3c0] sm:$0xff]
    %v194 = vld [vmem:[#allocation2 + $0x3c8] sm:$0xff]
    %v195 = vld [vmem:[#allocation2 + $0x3d0] sm:$0xff]
    %v196 = vld [vmem:[#allocation2 + $0x3d8] sm:$0xff]
    %v197 = vld [vmem:[#allocation2 + $0x3e0] sm:$0xff]
    %v198 = vld [vmem:[#allocation2 + $0x3e8] sm:$0xff]
    %v199 = vld [vmem:[#allocation2 + $0x3f0] sm:$0xff]
    %v200 = vld [vmem:[#allocation2 + $0x3f8] sm:$0xff]
    %v201 = vld [vmem:[%s2] sm:$0xff]
    %v203 = vlaneseq
    %v204 = vshrl.u32 %v203, 7
    %v205 = vsub.s32 0, %v204
    %v206 = vrot.slane %v201, %v205
    %v207 = vlaneseq
    %v208 = vshrl.u32 %v207, 7
    %v209 = vsub.s32 1, %v208
    %v210 = vrot.slane %v201, %v209
    %v211 = vlaneseq
    %v212 = vshrl.u32 %v211, 7
    %v213 = vsub.s32 2, %v212
    %v214 = vrot.slane %v201, %v213
    %v215 = vlaneseq
    %v216 = vshrl.u32 %v215, 7
    %v217 = vsub.s32 3, %v216
    %v218 = vrot.slane %v201, %v217
    %v219 = vlaneseq
    %v220 = vshrl.u32 %v219, 7
    %v221 = vsub.s32 4, %v220
    %v222 = vrot.slane %v201, %v221
    %v223 = vlaneseq
    %v224 = vshrl.u32 %v223, 7
    %v225 = vsub.s32 5, %v224
    %v226 = vrot.slane %v201, %v225
    %v227 = vlaneseq
    %v228 = vshrl.u32 %v227, 7
    %v229 = vsub.s32 6, %v228
    %v230 = vrot.slane %v201, %v229
    %v231 = vlaneseq
    %v232 = vshrl.u32 %v231, 7
    %v233 = vsub.s32 7, %v232
    %v234 = vrot.slane %v201, %v233
    %v371 = vunpack.c.l.b16 %v73
    %v372 = vunpack.c.h.b16 %v73
    %v373 = vunpack.c.l.b16 %v74
    %v374 = vunpack.c.h.b16 %v74
    %v375 = vunpack.c.l.b16 %v75
    %v376 = vunpack.c.h.b16 %v75
    %v377 = vunpack.c.l.b16 %v76
    %v378 = vunpack.c.h.b16 %v76
    %v379 = vunpack.c.l.b16 %v77
    %v380 = vunpack.c.h.b16 %v77
    %v381 = vunpack.c.l.b16 %v78
    %v382 = vunpack.c.h.b16 %v78
    %v383 = vunpack.c.l.b16 %v79
    %v384 = vunpack.c.h.b16 %v79
    %v385 = vunpack.c.l.b16 %v80
    %v386 = vunpack.c.h.b16 %v80
    %v387 = vunpack.c.l.b16 %v81
    %v388 = vunpack.c.h.b16 %v81
    %v389 = vunpack.c.l.b16 %v82
    %v390 = vunpack.c.h.b16 %v82
    %v391 = vunpack.c.l.b16 %v83
    %v392 = vunpack.c.h.b16 %v83
    %v393 = vunpack.c.l.b16 %v84
    %v394 = vunpack.c.h.b16 %v84
    %v395 = vunpack.c.l.b16 %v85
    %v396 = vunpack.c.h.b16 %v85
    %v397 = vunpack.c.l.b16 %v86
    %v398 = vunpack.c.h.b16 %v86
    %v399 = vunpack.c.l.b16 %v87
    %v400 = vunpack.c.h.b16 %v87
    %v401 = vunpack.c.l.b16 %v88
    %v402 = vunpack.c.h.b16 %v88
    %v403 = vunpack.c.l.b16 %v89
    %v404 = vunpack.c.h.b16 %v89
    %v405 = vunpack.c.l.b16 %v90
    %v406 = vunpack.c.h.b16 %v90
    %v407 = vunpack.c.l.b16 %v91
    %v408 = vunpack.c.h.b16 %v91
    %v409 = vunpack.c.l.b16 %v92
    %v410 = vunpack.c.h.b16 %v92
    %v411 = vunpack.c.l.b16 %v93
    %v412 = vunpack.c.h.b16 %v93
    %v413 = vunpack.c.l.b16 %v94
    %v414 = vunpack.c.h.b16 %v94
    %v415 = vunpack.c.l.b16 %v95
    %v416 = vunpack.c.h.b16 %v95
    %v417 = vunpack.c.l.b16 %v96
    %v418 = vunpack.c.h.b16 %v96
    %v419 = vunpack.c.l.b16 %v97
    %v420 = vunpack.c.h.b16 %v97
    %v421 = vunpack.c.l.b16 %v98
    %v422 = vunpack.c.h.b16 %v98
    %v423 = vunpack.c.l.b16 %v99
    %v424 = vunpack.c.h.b16 %v99
    %v425 = vunpack.c.l.b16 %v100
    %v426 = vunpack.c.h.b16 %v100
    %v427 = vunpack.c.l.b16 %v101
    %v428 = vunpack.c.h.b16 %v101
    %v429 = vunpack.c.l.b16 %v102
    %v430 = vunpack.c.h.b16 %v102
    %v431 = vunpack.c.l.b16 %v103
    %v432 = vunpack.c.h.b16 %v103
    %v433 = vunpack.c.l.b16 %v104
    %v434 = vunpack.c.h.b16 %v104
    %v435 = vunpack.c.l.b16 %v105
    %v436 = vunpack.c.h.b16 %v105
    %v437 = vunpack.c.l.b16 %v106
    %v438 = vunpack.c.h.b16 %v106
    %v439 = vunpack.c.l.b16 %v107
    %v440 = vunpack.c.h.b16 %v107
    %v441 = vunpack.c.l.b16 %v108
    %v442 = vunpack.c.h.b16 %v108
    %v443 = vunpack.c.l.b16 %v109
    %v444 = vunpack.c.h.b16 %v109
    %v445 = vunpack.c.l.b16 %v110
    %v446 = vunpack.c.h.b16 %v110
    %v447 = vunpack.c.l.b16 %v111
    %v448 = vunpack.c.h.b16 %v111
    %v449 = vunpack.c.l.b16 %v112
    %v450 = vunpack.c.h.b16 %v112
    %v451 = vunpack.c.l.b16 %v113
    %v452 = vunpack.c.h.b16 %v113
    %v453 = vunpack.c.l.b16 %v114
    %v454 = vunpack.c.h.b16 %v114
    %v455 = vunpack.c.l.b16 %v115
    %v456 = vunpack.c.h.b16 %v115
    %v457 = vunpack.c.l.b16 %v116
    %v458 = vunpack.c.h.b16 %v116
    %v459 = vunpack.c.l.b16 %v117
    %v460 = vunpack.c.h.b16 %v117
    %v461 = vunpack.c.l.b16 %v118
    %v462 = vunpack.c.h.b16 %v118
    %v463 = vunpack.c.l.b16 %v119
    %v464 = vunpack.c.h.b16 %v119
    %v465 = vunpack.c.l.b16 %v120
    %v466 = vunpack.c.h.b16 %v120
    %v467 = vunpack.c.l.b16 %v121
    %v468 = vunpack.c.h.b16 %v121
    %v469 = vunpack.c.l.b16 %v122
    %v470 = vunpack.c.h.b16 %v122
    %v471 = vunpack.c.l.b16 %v123
    %v472 = vunpack.c.h.b16 %v123
    %v473 = vunpack.c.l.b16 %v124
    %v474 = vunpack.c.h.b16 %v124
    %v475 = vunpack.c.l.b16 %v125
    %v476 = vunpack.c.h.b16 %v125
    %v477 = vunpack.c.l.b16 %v126
    %v478 = vunpack.c.h.b16 %v126
    %v479 = vunpack.c.l.b16 %v127
    %v480 = vunpack.c.h.b16 %v127
    %v481 = vunpack.c.l.b16 %v128
    %v482 = vunpack.c.h.b16 %v128
    %v483 = vunpack.c.l.b16 %v129
    %v484 = vunpack.c.h.b16 %v129
    %v485 = vunpack.c.l.b16 %v130
    %v486 = vunpack.c.h.b16 %v130
    %v487 = vunpack.c.l.b16 %v131
    %v488 = vunpack.c.h.b16 %v131
    %v489 = vunpack.c.l.b16 %v132
    %v490 = vunpack.c.h.b16 %v132
    %v491 = vunpack.c.l.b16 %v133
    %v492 = vunpack.c.h.b16 %v133
    %v493 = vunpack.c.l.b16 %v134
    %v494 = vunpack.c.h.b16 %v134
    %v495 = vunpack.c.l.b16 %v135
    %v496 = vunpack.c.h.b16 %v135
    %v497 = vunpack.c.l.b16 %v136
    %v498 = vunpack.c.h.b16 %v136
    %v499 = vunpack.c.l.b16 %v137
    %v500 = vunpack.c.h.b16 %v137
    %v501 = vunpack.c.l.b16 %v138
    %v502 = vunpack.c.h.b16 %v138
    %v503 = vunpack.c.l.b16 %v139
    %v504 = vunpack.c.h.b16 %v139
    %v505 = vunpack.c.l.b16 %v140
    %v506 = vunpack.c.h.b16 %v140
    %v507 = vunpack.c.l.b16 %v141
    %v508 = vunpack.c.h.b16 %v141
    %v509 = vunpack.c.l.b16 %v142
    %v510 = vunpack.c.h.b16 %v142
    %v511 = vunpack.c.l.b16 %v143
    %v512 = vunpack.c.h.b16 %v143
    %v513 = vunpack.c.l.b16 %v144
    %v514 = vunpack.c.h.b16 %v144
    %v515 = vunpack.c.l.b16 %v145
    %v516 = vunpack.c.h.b16 %v145
    %v517 = vunpack.c.l.b16 %v146
    %v518 = vunpack.c.h.b16 %v146
    %v519 = vunpack.c.l.b16 %v147
    %v520 = vunpack.c.h.b16 %v147
    %v521 = vunpack.c.l.b16 %v148
    %v522 = vunpack.c.h.b16 %v148
    %v523 = vunpack.c.l.b16 %v149
    %v524 = vunpack.c.h.b16 %v149
    %v525 = vunpack.c.l.b16 %v150
    %v526 = vunpack.c.h.b16 %v150
    %v527 = vunpack.c.l.b16 %v151
    %v528 = vunpack.c.h.b16 %v151
    %v529 = vunpack.c.l.b16 %v152
    %v530 = vunpack.c.h.b16 %v152
    %v531 = vunpack.c.l.b16 %v153
    %v532 = vunpack.c.h.b16 %v153
    %v533 = vunpack.c.l.b16 %v154
    %v534 = vunpack.c.h.b16 %v154
    %v535 = vunpack.c.l.b16 %v155
    %v536 = vunpack.c.h.b16 %v155
    %v537 = vunpack.c.l.b16 %v156
    %v538 = vunpack.c.h.b16 %v156
    %v539 = vunpack.c.l.b16 %v157
    %v540 = vunpack.c.h.b16 %v157
    %v541 = vunpack.c.l.b16 %v158
    %v542 = vunpack.c.h.b16 %v158
    %v543 = vunpack.c.l.b16 %v159
    %v544 = vunpack.c.h.b16 %v159
    %v545 = vunpack.c.l.b16 %v160
    %v546 = vunpack.c.h.b16 %v160
    %v547 = vunpack.c.l.b16 %v161
    %v548 = vunpack.c.h.b16 %v161
    %v549 = vunpack.c.l.b16 %v162
    %v550 = vunpack.c.h.b16 %v162
    %v551 = vunpack.c.l.b16 %v163
    %v552 = vunpack.c.h.b16 %v163
    %v553 = vunpack.c.l.b16 %v164
    %v554 = vunpack.c.h.b16 %v164
    %v555 = vunpack.c.l.b16 %v165
    %v556 = vunpack.c.h.b16 %v165
    %v557 = vunpack.c.l.b16 %v166
    %v558 = vunpack.c.h.b16 %v166
    %v559 = vunpack.c.l.b16 %v167
    %v560 = vunpack.c.h.b16 %v167
    %v561 = vunpack.c.l.b16 %v168
    %v562 = vunpack.c.h.b16 %v168
    %v563 = vunpack.c.l.b16 %v169
    %v564 = vunpack.c.h.b16 %v169
    %v565 = vunpack.c.l.b16 %v170
    %v566 = vunpack.c.h.b16 %v170
    %v567 = vunpack.c.l.b16 %v171
    %v568 = vunpack.c.h.b16 %v171
    %v569 = vunpack.c.l.b16 %v172
    %v570 = vunpack.c.h.b16 %v172
    %v571 = vunpack.c.l.b16 %v173
    %v572 = vunpack.c.h.b16 %v173
    %v573 = vunpack.c.l.b16 %v174
    %v574 = vunpack.c.h.b16 %v174
    %v575 = vunpack.c.l.b16 %v175
    %v576 = vunpack.c.h.b16 %v175
    %v577 = vunpack.c.l.b16 %v176
    %v578 = vunpack.c.h.b16 %v176
    %v579 = vunpack.c.l.b16 %v177
    %v580 = vunpack.c.h.b16 %v177
    %v581 = vunpack.c.l.b16 %v178
    %v582 = vunpack.c.h.b16 %v178
    %v583 = vunpack.c.l.b16 %v179
    %v584 = vunpack.c.h.b16 %v179
    %v585 = vunpack.c.l.b16 %v180
    %v586 = vunpack.c.h.b16 %v180
    %v587 = vunpack.c.l.b16 %v181
    %v588 = vunpack.c.h.b16 %v181
    %v589 = vunpack.c.l.b16 %v182
    %v590 = vunpack.c.h.b16 %v182
    %v591 = vunpack.c.l.b16 %v183
    %v592 = vunpack.c.h.b16 %v183
    %v593 = vunpack.c.l.b16 %v184
    %v594 = vunpack.c.h.b16 %v184
    %v595 = vunpack.c.l.b16 %v185
    %v596 = vunpack.c.h.b16 %v185
    %v597 = vunpack.c.l.b16 %v186
    %v598 = vunpack.c.h.b16 %v186
    %v599 = vunpack.c.l.b16 %v187
    %v600 = vunpack.c.h.b16 %v187
    %v601 = vunpack.c.l.b16 %v188
    %v602 = vunpack.c.h.b16 %v188
    %v603 = vunpack.c.l.b16 %v189
    %v604 = vunpack.c.h.b16 %v189
    %v605 = vunpack.c.l.b16 %v190
    %v606 = vunpack.c.h.b16 %v190
    %v607 = vunpack.c.l.b16 %v191
    %v608 = vunpack.c.h.b16 %v191
    %v609 = vunpack.c.l.b16 %v192
    %v610 = vunpack.c.h.b16 %v192
    %v611 = vunpack.c.l.b16 %v193
    %v612 = vunpack.c.h.b16 %v193
    %v613 = vunpack.c.l.b16 %v194
    %v614 = vunpack.c.h.b16 %v194
    %v615 = vunpack.c.l.b16 %v195
    %v616 = vunpack.c.h.b16 %v195
    %v617 = vunpack.c.l.b16 %v196
    %v618 = vunpack.c.h.b16 %v196
    %v619 = vunpack.c.l.b16 %v197
    %v620 = vunpack.c.h.b16 %v197
    %v621 = vunpack.c.l.b16 %v198
    %v622 = vunpack.c.h.b16 %v198
    %v623 = vunpack.c.l.b16 %v199
    %v624 = vunpack.c.h.b16 %v199
    %v625 = vunpack.c.l.b16 %v200
    %v626 = vunpack.c.h.b16 %v200
    %v627 = vpack.c.b16 %v379, %v371
    %v628 = vpack.c.b16 %v380, %v372
    %v629 = vpack.c.b16 %v381, %v373
    %v630 = vpack.c.b16 %v382, %v374
    %v631 = vpack.c.b16 %v383, %v375
    %v632 = vpack.c.b16 %v384, %v376
    %v633 = vpack.c.b16 %v385, %v377
    %v634 = vpack.c.b16 %v386, %v378
    %v635 = vpack.c.b16 %v395, %v387
    %v636 = vpack.c.b16 %v396, %v388
    %v637 = vpack.c.b16 %v397, %v389
    %v638 = vpack.c.b16 %v398, %v390
    %v639 = vpack.c.b16 %v399, %v391
    %v640 = vpack.c.b16 %v400, %v392
    %v641 = vpack.c.b16 %v401, %v393
    %v642 = vpack.c.b16 %v402, %v394
    %v643 = vpack.c.b16 %v411, %v403
    %v644 = vpack.c.b16 %v412, %v404
    %v645 = vpack.c.b16 %v413, %v405
    %v646 = vpack.c.b16 %v414, %v406
    %v647 = vpack.c.b16 %v415, %v407
    %v648 = vpack.c.b16 %v416, %v408
    %v649 = vpack.c.b16 %v417, %v409
    %v650 = vpack.c.b16 %v418, %v410
    %v651 = vpack.c.b16 %v427, %v419
    %v652 = vpack.c.b16 %v428, %v420
    %v653 = vpack.c.b16 %v429, %v421
    %v654 = vpack.c.b16 %v430, %v422
    %v655 = vpack.c.b16 %v431, %v423
    %v656 = vpack.c.b16 %v432, %v424
    %v657 = vpack.c.b16 %v433, %v425
    %v658 = vpack.c.b16 %v434, %v426
    %v659 = vpack.c.b16 %v443, %v435
    %v660 = vpack.c.b16 %v444, %v436
    %v661 = vpack.c.b16 %v445, %v437
    %v662 = vpack.c.b16 %v446, %v438
    %v663 = vpack.c.b16 %v447, %v439
    %v664 = vpack.c.b16 %v448, %v440
    %v665 = vpack.c.b16 %v449, %v441
    %v666 = vpack.c.b16 %v450, %v442
    %v667 = vpack.c.b16 %v459, %v451
    %v668 = vpack.c.b16 %v460, %v452
    %v669 = vpack.c.b16 %v461, %v453
    %v670 = vpack.c.b16 %v462, %v454
    %v671 = vpack.c.b16 %v463, %v455
    %v672 = vpack.c.b16 %v464, %v456
    %v673 = vpack.c.b16 %v465, %v457
    %v674 = vpack.c.b16 %v466, %v458
    %v675 = vpack.c.b16 %v475, %v467
    %v676 = vpack.c.b16 %v476, %v468
    %v677 = vpack.c.b16 %v477, %v469
    %v678 = vpack.c.b16 %v478, %v470
    %v679 = vpack.c.b16 %v479, %v471
    %v680 = vpack.c.b16 %v480, %v472
    %v681 = vpack.c.b16 %v481, %v473
    %v682 = vpack.c.b16 %v482, %v474
    %v683 = vpack.c.b16 %v491, %v483
    %v684 = vpack.c.b16 %v492, %v484
    %v685 = vpack.c.b16 %v493, %v485
    %v686 = vpack.c.b16 %v494, %v486
    %v687 = vpack.c.b16 %v495, %v487
    %v688 = vpack.c.b16 %v496, %v488
    %v689 = vpack.c.b16 %v497, %v489
    %v690 = vpack.c.b16 %v498, %v490
    %v691 = vpack.c.b16 %v507, %v499
    %v692 = vpack.c.b16 %v508, %v500
    %v693 = vpack.c.b16 %v509, %v501
    %v694 = vpack.c.b16 %v510, %v502
    %v695 = vpack.c.b16 %v511, %v503
    %v696 = vpack.c.b16 %v512, %v504
    %v697 = vpack.c.b16 %v513, %v505
    %v698 = vpack.c.b16 %v514, %v506
    %v699 = vpack.c.b16 %v523, %v515
    %v700 = vpack.c.b16 %v524, %v516
    %v701 = vpack.c.b16 %v525, %v517
    %v702 = vpack.c.b16 %v526, %v518
    %v703 = vpack.c.b16 %v527, %v519
    %v704 = vpack.c.b16 %v528, %v520
    %v705 = vpack.c.b16 %v529, %v521
    %v706 = vpack.c.b16 %v530, %v522
    %v707 = vpack.c.b16 %v539, %v531
    %v708 = vpack.c.b16 %v540, %v532
    %v709 = vpack.c.b16 %v541, %v533
    %v710 = vpack.c.b16 %v542, %v534
    %v711 = vpack.c.b16 %v543, %v535
    %v712 = vpack.c.b16 %v544, %v536
    %v713 = vpack.c.b16 %v545, %v537
    %v714 = vpack.c.b16 %v546, %v538
    %v715 = vpack.c.b16 %v555, %v547
    %v716 = vpack.c.b16 %v556, %v548
    %v717 = vpack.c.b16 %v557, %v549
    %v718 = vpack.c.b16 %v558, %v550
    %v719 = vpack.c.b16 %v559, %v551
    %v720 = vpack.c.b16 %v560, %v552
    %v721 = vpack.c.b16 %v561, %v553
    %v722 = vpack.c.b16 %v562, %v554
    %v723 = vpack.c.b16 %v571, %v563
    %v724 = vpack.c.b16 %v572, %v564
    %v725 = vpack.c.b16 %v573, %v565
    %v726 = vpack.c.b16 %v574, %v566
    %v727 = vpack.c.b16 %v575, %v567
    %v728 = vpack.c.b16 %v576, %v568
    %v729 = vpack.c.b16 %v577, %v569
    %v730 = vpack.c.b16 %v578, %v570
    %v731 = vpack.c.b16 %v587, %v579
    %v732 = vpack.c.b16 %v588, %v580
    %v733 = vpack.c.b16 %v589, %v581
    %v734 = vpack.c.b16 %v590, %v582
    %v735 = vpack.c.b16 %v591, %v583
    %v736 = vpack.c.b16 %v592, %v584
    %v737 = vpack.c.b16 %v593, %v585
    %v738 = vpack.c.b16 %v594, %v586
    %v739 = vpack.c.b16 %v603, %v595
    %v740 = vpack.c.b16 %v604, %v596
    %v741 = vpack.c.b16 %v605, %v597
    %v742 = vpack.c.b16 %v606, %v598
    %v743 = vpack.c.b16 %v607, %v599
    %v744 = vpack.c.b16 %v608, %v600
    %v745 = vpack.c.b16 %v609, %v601
    %v746 = vpack.c.b16 %v610, %v602
    %v747 = vpack.c.b16 %v619, %v611
    %v748 = vpack.c.b16 %v620, %v612
    %v749 = vpack.c.b16 %v621, %v613
    %v750 = vpack.c.b16 %v622, %v614
    %v751 = vpack.c.b16 %v623, %v615
    %v752 = vpack.c.b16 %v624, %v616
    %v753 = vpack.c.b16 %v625, %v617
    %v754 = vpack.c.b16 %v626, %v618
    %883 = vmatprep.subr.bf16.mxu0 %v628
    %884 = vmatpush1.bf16.msra.mxu0 %v627
    %885 = vmatprep.subr.bf16.mxu0 %v636
    %886 = vmatpush1.bf16.msra.mxu0 %v635
    %887 = vmatprep.subr.bf16.mxu0 %v644
    %888 = vmatpush1.bf16.msra.mxu0 %v643
    %889 = vmatprep.subr.bf16.mxu0 %v652
    %890 = vmatpush1.bf16.msra.mxu0 %v651
    %891 = vmatprep.subr.bf16.mxu0 %v660
    %892 = vmatpush1.bf16.msra.mxu0 %v659
    %893 = vmatprep.subr.bf16.mxu0 %v668
    %894 = vmatpush1.bf16.msra.mxu0 %v667
    %895 = vmatprep.subr.bf16.mxu0 %v676
    %896 = vmatpush1.bf16.msra.mxu0 %v675
    %897 = vmatprep.subr.bf16.mxu0 %v684
    %898 = vmatpush1.bf16.msra.mxu0 %v683
    %899 = vmatprep.subr.bf16.mxu0 %v692
    %900 = vmatpush1.bf16.msra.mxu0 %v691
    %901 = vmatprep.subr.bf16.mxu0 %v700
    %902 = vmatpush1.bf16.msra.mxu0 %v699
    %903 = vmatprep.subr.bf16.mxu0 %v708
    %904 = vmatpush1.bf16.msra.mxu0 %v707
    %905 = vmatprep.subr.bf16.mxu0 %v716
    %906 = vmatpush1.bf16.msra.mxu0 %v715
    %907 = vmatprep.subr.bf16.mxu0 %v724
    %908 = vmatpush1.bf16.msra.mxu0 %v723
    %909 = vmatprep.subr.bf16.mxu0 %v732
    %910 = vmatpush1.bf16.msra.mxu0 %v731
    %911 = vmatprep.subr.bf16.mxu0 %v740
    %912 = vmatpush1.bf16.msra.mxu0 %v739
    %913 = vmatprep.subr.bf16.mxu0 %v748
    %914 = vmatpush1.bf16.msra.mxu0 %v747
    %915 = vmatprep.mubr.bf16.mxu0 %v72
    %916 = vmatmul.mubr.bf16.gmra.mrb[0].mxu0 %v71
    %v917 = vpop.f32.mrb[0].mxu0
    %v918 = vadd.f32 %v206, %v917
    %v919 = vpop.f32.mrb[0].mxu0
    %v920 = vadd.f32 %v210, %v919
    %v921 = vpop.f32.mrb[0].mxu0
    %v922 = vpop.f32.mrb[0].mxu0
    %923 = vdwg.mxu0
    %924 = vmatprep.subr.bf16.mxu0 %v630
    %925 = vmatpush1.bf16.msra.mxu0 %v629
    %926 = vmatprep.subr.bf16.mxu0 %v638
    %927 = vmatpush1.bf16.msra.mxu0 %v637
    %928 = vmatprep.subr.bf16.mxu0 %v646
    %929 = vmatpush1.bf16.msra.mxu0 %v645
    %930 = vmatprep.subr.bf16.mxu0 %v654
    %931 = vmatpush1.bf16.msra.mxu0 %v653
    %932 = vmatprep.subr.bf16.mxu0 %v662
    %933 = vmatpush1.bf16.msra.mxu0 %v661
    %934 = vmatprep.subr.bf16.mxu0 %v670
    %935 = vmatpush1.bf16.msra.mxu0 %v669
    %936 = vmatprep.subr.bf16.mxu0 %v678
    %937 = vmatpush1.bf16.msra.mxu0 %v677
    %938 = vmatprep.subr.bf16.mxu0 %v686
    %939 = vmatpush1.bf16.msra.mxu0 %v685
    %940 = vmatprep.subr.bf16.mxu0 %v694
    %941 = vmatpush1.bf16.msra.mxu0 %v693
    %942 = vmatprep.subr.bf16.mxu0 %v702
    %943 = vmatpush1.bf16.msra.mxu0 %v701
    %944 = vmatprep.subr.bf16.mxu0 %v710
    %945 = vmatpush1.bf16.msra.mxu0 %v709
    %946 = vmatprep.subr.bf16.mxu0 %v718
    %947 = vmatpush1.bf16.msra.mxu0 %v717
    %948 = vmatprep.subr.bf16.mxu0 %v726
    %949 = vmatpush1.bf16.msra.mxu0 %v725
    %950 = vmatprep.subr.bf16.mxu0 %v734
    %951 = vmatpush1.bf16.msra.mxu0 %v733
    %952 = vmatprep.subr.bf16.mxu0 %v742
    %953 = vmatpush1.bf16.msra.mxu0 %v741
    %954 = vmatprep.subr.bf16.mxu0 %v750
    %955 = vmatpush1.bf16.msra.mxu0 %v749
    %956 = vmatprep.mubr.bf16.mxu0 %v72
    %957 = vmatmul.mubr.bf16.gmra.mrb[0].mxu0 %v71
    %v958 = vpop.f32.mrb[0].mxu0
    %v959 = vadd.f32 %v214, %v958
    %v960 = vpop.f32.mrb[0].mxu0
    %v961 = vadd.f32 %v218, %v960
    %v962 = vpop.f32.mrb[0].mxu0
    %v963 = vpop.f32.mrb[0].mxu0
    %964 = vdwg.mxu0
    %965 = vmatprep.subr.bf16.mxu0 %v632
    %966 = vmatpush1.bf16.msra.mxu0 %v631
    %967 = vmatprep.subr.bf16.mxu0 %v640
    %968 = vmatpush1.bf16.msra.mxu0 %v639
    %969 = vmatprep.subr.bf16.mxu0 %v648
    %970 = vmatpush1.bf16.msra.mxu0 %v647
    %971 = vmatprep.subr.bf16.mxu0 %v656
    %972 = vmatpush1.bf16.msra.mxu0 %v655
    %973 = vmatprep.subr.bf16.mxu0 %v664
    %974 = vmatpush1.bf16.msra.mxu0 %v663
    %975 = vmatprep.subr.bf16.mxu0 %v672
    %976 = vmatpush1.bf16.msra.mxu0 %v671
    %977 = vmatprep.subr.bf16.mxu0 %v680
    %978 = vmatpush1.bf16.msra.mxu0 %v679
    %979 = vmatprep.subr.bf16.mxu0 %v688
    %980 = vmatpush1.bf16.msra.mxu0 %v687
    %981 = vmatprep.subr.bf16.mxu0 %v696
    %982 = vmatpush1.bf16.msra.mxu0 %v695
    %983 = vmatprep.subr.bf16.mxu0 %v704
    %984 = vmatpush1.bf16.msra.mxu0 %v703
    %985 = vmatprep.subr.bf16.mxu0 %v712
    %986 = vmatpush1.bf16.msra.mxu0 %v711
    %987 = vmatprep.subr.bf16.mxu0 %v720
    %988 = vmatpush1.bf16.msra.mxu0 %v719
    %989 = vmatprep.subr.bf16.mxu0 %v728
    %990 = vmatpush1.bf16.msra.mxu0 %v727
    %991 = vmatprep.subr.bf16.mxu0 %v736
    %992 = vmatpush1.bf16.msra.mxu0 %v735
    %993 = vmatprep.subr.bf16.mxu0 %v744
    %994 = vmatpush1.bf16.msra.mxu0 %v743
    %995 = vmatprep.subr.bf16.mxu0 %v752
    %996 = vmatpush1.bf16.msra.mxu0 %v751
    %997 = vmatprep.mubr.bf16.mxu0 %v72
    %998 = vmatmul.mubr.bf16.gmra.mrb[0].mxu0 %v71
    %v999 = vpop.f32.mrb[0].mxu0
    %v1000 = vadd.f32 %v222, %v999
    %v1001 = vpop.f32.mrb[0].mxu0
    %v1002 = vadd.f32 %v226, %v1001
    %v1003 = vpop.f32.mrb[0].mxu0
    %v1004 = vpop.f32.mrb[0].mxu0
    %1005 = vdwg.mxu0
    %1006 = vmatprep.subr.bf16.mxu0 %v634
    %1007 = vmatpush1.bf16.msra.mxu0 %v633
    %1008 = vmatprep.subr.bf16.mxu0 %v642
    %1009 = vmatpush1.bf16.msra.mxu0 %v641
    %1010 = vmatprep.subr.bf16.mxu0 %v650
    %1011 = vmatpush1.bf16.msra.mxu0 %v649
    %1012 = vmatprep.subr.bf16.mxu0 %v658
    %1013 = vmatpush1.bf16.msra.mxu0 %v657
    %1014 = vmatprep.subr.bf16.mxu0 %v666
    %1015 = vmatpush1.bf16.msra.mxu0 %v665
    %1016 = vmatprep.subr.bf16.mxu0 %v674
    %1017 = vmatpush1.bf16.msra.mxu0 %v673
    %1018 = vmatprep.subr.bf16.mxu0 %v682
    %1019 = vmatpush1.bf16.msra.mxu0 %v681
    %1020 = vmatprep.subr.bf16.mxu0 %v690
    %1021 = vmatpush1.bf16.msra.mxu0 %v689
    %1022 = vmatprep.subr.bf16.mxu0 %v698
    %1023 = vmatpush1.bf16.msra.mxu0 %v697
    %1024 = vmatprep.subr.bf16.mxu0 %v706
    %1025 = vmatpush1.bf16.msra.mxu0 %v705
    %1026 = vmatprep.subr.bf16.mxu0 %v714
    %1027 = vmatpush1.bf16.msra.mxu0 %v713
    %1028 = vmatprep.subr.bf16.mxu0 %v722
    %1029 = vmatpush1.bf16.msra.mxu0 %v721
    %1030 = vmatprep.subr.bf16.mxu0 %v730
    %1031 = vmatpush1.bf16.msra.mxu0 %v729
    %1032 = vmatprep.subr.bf16.mxu0 %v738
    %1033 = vmatpush1.bf16.msra.mxu0 %v737
    %1034 = vmatprep.subr.bf16.mxu0 %v746
    %1035 = vmatpush1.bf16.msra.mxu0 %v745
    %1036 = vmatprep.subr.bf16.mxu0 %v754
    %1037 = vmatpush1.bf16.msra.mxu0 %v753
    %1038 = vmatprep.mubr.bf16.mxu0 %v72
    %1039 = vmatmul.mubr.bf16.gmra.mrb[0].mxu0 %v71
    %v1040 = vpop.f32.mrb[0].mxu0
    %v1041 = vadd.f32 %v230, %v1040
    %v1042 = vpop.f32.mrb[0].mxu0
    %v1043 = vadd.f32 %v234, %v1042
    %v1044 = vpop.f32.mrb[0].mxu0
    %v1045 = vpop.f32.mrb[0].mxu0
    %1046 = vdwg.mxu0
    %v1047 = vmax.f32 %v918, 0.0
    %v1048 = vmax.f32 %v920, 0.0
    %v1049 = vmax.f32 %v959, 0.0
    %v1050 = vmax.f32 %v961, 0.0
    %v1051 = vmax.f32 %v1000, 0.0
    %v1052 = vmax.f32 %v1002, 0.0
    %v1053 = vmax.f32 %v1041, 0.0
    %v1054 = vmax.f32 %v1043, 0.0
    %v1055 = vpack.c.bf16 %v1047, %v1047
    %v1056 = vpack.c.bf16 %v1048, %v1048
    %v1057 = vpack.c.bf16 %v1049, %v1049
    %v1058 = vpack.c.bf16 %v1050, %v1050
    %v1059 = vpack.c.bf16 %v1051, %v1051
    %v1060 = vpack.c.bf16 %v1052, %v1052
    %v1061 = vpack.c.bf16 %v1053, %v1053
    %v1062 = vpack.c.bf16 %v1054, %v1054
    %v1063 = vld [vmem:[#allocation5] sm:$0xff]
    %v1064 = vld [vmem:[#allocation5 + $0x8] sm:$0xff]
    %v1065 = vld [vmem:[#allocation5 + $0x10] sm:$0xff]
    %v1066 = vld [vmem:[#allocation5 + $0x18] sm:$0xff]
    %v1067 = vld [vmem:[#allocation5 + $0x20] sm:$0xff]
    %v1068 = vld [vmem:[#allocation5 + $0x28] sm:$0xff]
    %v1069 = vld [vmem:[#allocation5 + $0x30] sm:$0xff]
    %v1070 = vld [vmem:[#allocation5 + $0x38] sm:$0xff]
    %v1071 = vld [vmem:[#allocation5 + $0x40] sm:$0xff]
    %v1072 = vld [vmem:[#allocation5 + $0x48] sm:$0xff]
    %v1073 = vld [vmem:[#allocation5 + $0x50] sm:$0xff]
    %v1074 = vld [vmem:[#allocation5 + $0x58] sm:$0xff]
    %v1075 = vld [vmem:[#allocation5 + $0x60] sm:$0xff]
    %v1076 = vld [vmem:[#allocation5 + $0x68] sm:$0xff]
    %v1077 = vld [vmem:[#allocation5 + $0x70] sm:$0xff]
    %v1078 = vld [vmem:[#allocation5 + $0x78] sm:$0xff]
    %v1079 = vld [vmem:[#allocation5 + $0x80] sm:$0xff]
    %v1080 = vld [vmem:[#allocation5 + $0x88] sm:$0xff]
    %v1081 = vld [vmem:[#allocation5 + $0x90] sm:$0xff]
    %v1082 = vld [vmem:[#allocation5 + $0x98] sm:$0xff]
    %v1083 = vld [vmem:[#allocation5 + $0xa0] sm:$0xff]
    %v1084 = vld [vmem:[#allocation5 + $0xa8] sm:$0xff]
    %v1085 = vld [vmem:[#allocation5 + $0xb0] sm:$0xff]
    %v1086 = vld [vmem:[#allocation5 + $0xb8] sm:$0xff]
    %v1087 = vld [vmem:[#allocation5 + $0xc0] sm:$0xff]
    %v1088 = vld [vmem:[#allocation5 + $0xc8] sm:$0xff]
    %v1089 = vld [vmem:[#allocation5 + $0xd0] sm:$0xff]
    %v1090 = vld [vmem:[#allocation5 + $0xd8] sm:$0xff]
    %v1091 = vld [vmem:[#allocation5 + $0xe0] sm:$0xff]
    %v1092 = vld [vmem:[#allocation5 + $0xe8] sm:$0xff]
    %v1093 = vld [vmem:[#allocation5 + $0xf0] sm:$0xff]
    %v1094 = vld [vmem:[#allocation5 + $0xf8] sm:$0xff]
    %v1095 = vld [vmem:[#allocation5 + $0x100] sm:$0xff]
    %v1096 = vld [vmem:[#allocation5 + $0x108] sm:$0xff]
    %v1097 = vld [vmem:[#allocation5 + $0x110] sm:$0xff]
    %v1098 = vld [vmem:[#allocation5 + $0x118] sm:$0xff]
    %v1099 = vld [vmem:[#allocation5 + $0x120] sm:$0xff]
    %v1100 = vld [vmem:[#allocation5 + $0x128] sm:$0xff]
    %v1101 = vld [vmem:[#allocation5 + $0x130] sm:$0xff]
    %v1102 = vld [vmem:[#allocation5 + $0x138] sm:$0xff]
    %v1103 = vld [vmem:[#allocation5 + $0x140] sm:$0xff]
    %v1104 = vld [vmem:[#allocation5 + $0x148] sm:$0xff]
    %v1105 = vld [vmem:[#allocation5 + $0x150] sm:$0xff]
    %v1106 = vld [vmem:[#allocation5 + $0x158] sm:$0xff]
    %v1107 = vld [vmem:[#allocation5 + $0x160] sm:$0xff]
    %v1108 = vld [vmem:[#allocation5 + $0x168] sm:$0xff]
    %v1109 = vld [vmem:[#allocation5 + $0x170] sm:$0xff]
    %v1110 = vld [vmem:[#allocation5 + $0x178] sm:$0xff]
    %v1111 = vld [vmem:[#allocation5 + $0x180] sm:$0xff]
    %v1112 = vld [vmem:[#allocation5 + $0x188] sm:$0xff]
    %v1113 = vld [vmem:[#allocation5 + $0x190] sm:$0xff]
    %v1114 = vld [vmem:[#allocation5 + $0x198] sm:$0xff]
    %v1115 = vld [vmem:[#allocation5 + $0x1a0] sm:$0xff]
    %v1116 = vld [vmem:[#allocation5 + $0x1a8] sm:$0xff]
    %v1117 = vld [vmem:[#allocation5 + $0x1b0] sm:$0xff]
    %v1118 = vld [vmem:[#allocation5 + $0x1b8] sm:$0xff]
    %v1119 = vld [vmem:[#allocation5 + $0x1c0] sm:$0xff]
    %v1120 = vld [vmem:[#allocation5 + $0x1c8] sm:$0xff]
    %v1121 = vld [vmem:[#allocation5 + $0x1d0] sm:$0xff]
    %v1122 = vld [vmem:[#allocation5 + $0x1d8] sm:$0xff]
    %v1123 = vld [vmem:[#allocation5 + $0x1e0] sm:$0xff]
    %v1124 = vld [vmem:[#allocation5 + $0x1e8] sm:$0xff]
    %v1125 = vld [vmem:[#allocation5 + $0x1f0] sm:$0xff]
    %v1126 = vld [vmem:[#allocation5 + $0x1f8] sm:$0xff]
    %v1127 = vld [vmem:[#allocation5 + $0x200] sm:$0xff]
    %v1128 = vld [vmem:[#allocation5 + $0x208] sm:$0xff]
    %v1129 = vld [vmem:[#allocation5 + $0x210] sm:$0xff]
    %v1130 = vld [vmem:[#allocation5 + $0x218] sm:$0xff]
    %v1131 = vld [vmem:[#allocation5 + $0x220] sm:$0xff]
    %v1132 = vld [vmem:[#allocation5 + $0x228] sm:$0xff]
    %v1133 = vld [vmem:[#allocation5 + $0x230] sm:$0xff]
    %v1134 = vld [vmem:[#allocation5 + $0x238] sm:$0xff]
    %v1135 = vld [vmem:[#allocation5 + $0x240] sm:$0xff]
    %v1136 = vld [vmem:[#allocation5 + $0x248] sm:$0xff]
    %v1137 = vld [vmem:[#allocation5 + $0x250] sm:$0xff]
    %v1138 = vld [vmem:[#allocation5 + $0x258] sm:$0xff]
    %v1139 = vld [vmem:[#allocation5 + $0x260] sm:$0xff]
    %v1140 = vld [vmem:[#allocation5 + $0x268] sm:$0xff]
    %v1141 = vld [vmem:[#allocation5 + $0x270] sm:$0xff]
    %v1142 = vld [vmem:[#allocation5 + $0x278] sm:$0xff]
    %v1143 = vld [vmem:[#allocation5 + $0x280] sm:$0xff]
    %v1144 = vld [vmem:[#allocation5 + $0x288] sm:$0xff]
    %v1145 = vld [vmem:[#allocation5 + $0x290] sm:$0xff]
    %v1146 = vld [vmem:[#allocation5 + $0x298] sm:$0xff]
    %v1147 = vld [vmem:[#allocation5 + $0x2a0] sm:$0xff]
    %v1148 = vld [vmem:[#allocation5 + $0x2a8] sm:$0xff]
    %v1149 = vld [vmem:[#allocation5 + $0x2b0] sm:$0xff]
    %v1150 = vld [vmem:[#allocation5 + $0x2b8] sm:$0xff]
    %v1151 = vld [vmem:[#allocation5 + $0x2c0] sm:$0xff]
    %v1152 = vld [vmem:[#allocation5 + $0x2c8] sm:$0xff]
    %v1153 = vld [vmem:[#allocation5 + $0x2d0] sm:$0xff]
    %v1154 = vld [vmem:[#allocation5 + $0x2d8] sm:$0xff]
    %v1155 = vld [vmem:[#allocation5 + $0x2e0] sm:$0xff]
    %v1156 = vld [vmem:[#allocation5 + $0x2e8] sm:$0xff]
    %v1157 = vld [vmem:[#allocation5 + $0x2f0] sm:$0xff]
    %v1158 = vld [vmem:[#allocation5 + $0x2f8] sm:$0xff]
    %v1159 = vld [vmem:[#allocation5 + $0x300] sm:$0xff]
    %v1160 = vld [vmem:[#allocation5 + $0x308] sm:$0xff]
    %v1161 = vld [vmem:[#allocation5 + $0x310] sm:$0xff]
    %v1162 = vld [vmem:[#allocation5 + $0x318] sm:$0xff]
    %v1163 = vld [vmem:[#allocation5 + $0x320] sm:$0xff]
    %v1164 = vld [vmem:[#allocation5 + $0x328] sm:$0xff]
    %v1165 = vld [vmem:[#allocation5 + $0x330] sm:$0xff]
    %v1166 = vld [vmem:[#allocation5 + $0x338] sm:$0xff]
    %v1167 = vld [vmem:[#allocation5 + $0x340] sm:$0xff]
    %v1168 = vld [vmem:[#allocation5 + $0x348] sm:$0xff]
    %v1169 = vld [vmem:[#allocation5 + $0x350] sm:$0xff]
    %v1170 = vld [vmem:[#allocation5 + $0x358] sm:$0xff]
    %v1171 = vld [vmem:[#allocation5 + $0x360] sm:$0xff]
    %v1172 = vld [vmem:[#allocation5 + $0x368] sm:$0xff]
    %v1173 = vld [vmem:[#allocation5 + $0x370] sm:$0xff]
    %v1174 = vld [vmem:[#allocation5 + $0x378] sm:$0xff]
    %v1175 = vld [vmem:[#allocation5 + $0x380] sm:$0xff]
    %v1176 = vld [vmem:[#allocation5 + $0x388] sm:$0xff]
    %v1177 = vld [vmem:[#allocation5 + $0x390] sm:$0xff]
    %v1178 = vld [vmem:[#allocation5 + $0x398] sm:$0xff]
    %v1179 = vld [vmem:[#allocation5 + $0x3a0] sm:$0xff]
    %v1180 = vld [vmem:[#allocation5 + $0x3a8] sm:$0xff]
    %v1181 = vld [vmem:[#allocation5 + $0x3b0] sm:$0xff]
    %v1182 = vld [vmem:[#allocation5 + $0x3b8] sm:$0xff]
    %v1183 = vld [vmem:[#allocation5 + $0x3c0] sm:$0xff]
    %v1184 = vld [vmem:[#allocation5 + $0x3c8] sm:$0xff]
    %v1185 = vld [vmem:[#allocation5 + $0x3d0] sm:$0xff]
    %v1186 = vld [vmem:[#allocation5 + $0x3d8] sm:$0xff]
    %v1187 = vld [vmem:[#allocation5 + $0x3e0] sm:$0xff]
    %v1188 = vld [vmem:[#allocation5 + $0x3e8] sm:$0xff]
    %v1189 = vld [vmem:[#allocation5 + $0x3f0] sm:$0xff]
    %v1190 = vld [vmem:[#allocation5 + $0x3f8] sm:$0xff]
    %v1191 = vld [vmem:[#allocation5 + $0x400] sm:$0xff]
    %v1192 = vld [vmem:[#allocation5 + $0x408] sm:$0xff]
    %v1193 = vld [vmem:[#allocation5 + $0x410] sm:$0xff]
    %v1194 = vld [vmem:[#allocation5 + $0x418] sm:$0xff]
    %v1195 = vld [vmem:[#allocation5 + $0x420] sm:$0xff]
    %v1196 = vld [vmem:[#allocation5 + $0x428] sm:$0xff]
    %v1197 = vld [vmem:[#allocation5 + $0x430] sm:$0xff]
    %v1198 = vld [vmem:[#allocation5 + $0x438] sm:$0xff]
    %v1199 = vld [vmem:[#allocation5 + $0x440] sm:$0xff]
    %v1200 = vld [vmem:[#allocation5 + $0x448] sm:$0xff]
    %v1201 = vld [vmem:[#allocation5 + $0x450] sm:$0xff]
    %v1202 = vld [vmem:[#allocation5 + $0x458] sm:$0xff]
    %v1203 = vld [vmem:[#allocation5 + $0x460] sm:$0xff]
    %v1204 = vld [vmem:[#allocation5 + $0x468] sm:$0xff]
    %v1205 = vld [vmem:[#allocation5 + $0x470] sm:$0xff]
    %v1206 = vld [vmem:[#allocation5 + $0x478] sm:$0xff]
    %v1207 = vld [vmem:[#allocation5 + $0x480] sm:$0xff]
    %v1208 = vld [vmem:[#allocation5 + $0x488] sm:$0xff]
    %v1209 = vld [vmem:[#allocation5 + $0x490] sm:$0xff]
    %v1210 = vld [vmem:[#allocation5 + $0x498] sm:$0xff]
    %v1211 = vld [vmem:[#allocation5 + $0x4a0] sm:$0xff]
    %v1212 = vld [vmem:[#allocation5 + $0x4a8] sm:$0xff]
    %v1213 = vld [vmem:[#allocation5 + $0x4b0] sm:$0xff]
    %v1214 = vld [vmem:[#allocation5 + $0x4b8] sm:$0xff]
    %v1215 = vld [vmem:[#allocation5 + $0x4c0] sm:$0xff]
    %v1216 = vld [vmem:[#allocation5 + $0x4c8] sm:$0xff]
    %v1217 = vld [vmem:[#allocation5 + $0x4d0] sm:$0xff]
    %v1218 = vld [vmem:[#allocation5 + $0x4d8] sm:$0xff]
    %v1219 = vld [vmem:[#allocation5 + $0x4e0] sm:$0xff]
    %v1220 = vld [vmem:[#allocation5 + $0x4e8] sm:$0xff]
    %v1221 = vld [vmem:[#allocation5 + $0x4f0] sm:$0xff]
    %v1222 = vld [vmem:[#allocation5 + $0x4f8] sm:$0xff]
    %v1223 = vld [vmem:[#allocation5 + $0x500] sm:$0xff]
    %v1224 = vld [vmem:[#allocation5 + $0x508] sm:$0xff]
    %v1225 = vld [vmem:[#allocation5 + $0x510] sm:$0xff]
    %v1226 = vld [vmem:[#allocation5 + $0x518] sm:$0xff]
    %v1227 = vld [vmem:[#allocation5 + $0x520] sm:$0xff]
    %v1228 = vld [vmem:[#allocation5 + $0x528] sm:$0xff]
    %v1229 = vld [vmem:[#allocation5 + $0x530] sm:$0xff]
    %v1230 = vld [vmem:[#allocation5 + $0x538] sm:$0xff]
    %v1231 = vld [vmem:[#allocation5 + $0x540] sm:$0xff]
    %v1232 = vld [vmem:[#allocation5 + $0x548] sm:$0xff]
    %v1233 = vld [vmem:[#allocation5 + $0x550] sm:$0xff]
    %v1234 = vld [vmem:[#allocation5 + $0x558] sm:$0xff]
    %v1235 = vld [vmem:[#allocation5 + $0x560] sm:$0xff]
    %v1236 = vld [vmem:[#allocation5 + $0x568] sm:$0xff]
    %v1237 = vld [vmem:[#allocation5 + $0x570] sm:$0xff]
    %v1238 = vld [vmem:[#allocation5 + $0x578] sm:$0xff]
    %v1239 = vld [vmem:[#allocation5 + $0x580] sm:$0xff]
    %v1240 = vld [vmem:[#allocation5 + $0x588] sm:$0xff]
    %v1241 = vld [vmem:[#allocation5 + $0x590] sm:$0xff]
    %v1242 = vld [vmem:[#allocation5 + $0x598] sm:$0xff]
    %v1243 = vld [vmem:[#allocation5 + $0x5a0] sm:$0xff]
    %v1244 = vld [vmem:[#allocation5 + $0x5a8] sm:$0xff]
    %v1245 = vld [vmem:[#allocation5 + $0x5b0] sm:$0xff]
    %v1246 = vld [vmem:[#allocation5 + $0x5b8] sm:$0xff]
    %v1247 = vld [vmem:[#allocation5 + $0x5c0] sm:$0xff]
    %v1248 = vld [vmem:[#allocation5 + $0x5c8] sm:$0xff]
    %v1249 = vld [vmem:[#allocation5 + $0x5d0] sm:$0xff]
    %v1250 = vld [vmem:[#allocation5 + $0x5d8] sm:$0xff]
    %v1251 = vld [vmem:[#allocation5 + $0x5e0] sm:$0xff]
    %v1252 = vld [vmem:[#allocation5 + $0x5e8] sm:$0xff]
    %v1253 = vld [vmem:[#allocation5 + $0x5f0] sm:$0xff]
    %v1254 = vld [vmem:[#allocation5 + $0x5f8] sm:$0xff]
    %v1255 = vld [vmem:[#allocation5 + $0x600] sm:$0xff]
    %v1256 = vld [vmem:[#allocation5 + $0x608] sm:$0xff]
    %v1257 = vld [vmem:[#allocation5 + $0x610] sm:$0xff]
    %v1258 = vld [vmem:[#allocation5 + $0x618] sm:$0xff]
    %v1259 = vld [vmem:[#allocation5 + $0x620] sm:$0xff]
    %v1260 = vld [vmem:[#allocation5 + $0x628] sm:$0xff]
    %v1261 = vld [vmem:[#allocation5 + $0x630] sm:$0xff]
    %v1262 = vld [vmem:[#allocation5 + $0x638] sm:$0xff]
    %v1263 = vld [vmem:[#allocation5 + $0x640] sm:$0xff]
    %v1264 = vld [vmem:[#allocation5 + $0x648] sm:$0xff]
    %v1265 = vld [vmem:[#allocation5 + $0x650] sm:$0xff]
    %v1266 = vld [vmem:[#allocation5 + $0x658] sm:$0xff]
    %v1267 = vld [vmem:[#allocation5 + $0x660] sm:$0xff]
    %v1268 = vld [vmem:[#allocation5 + $0x668] sm:$0xff]
    %v1269 = vld [vmem:[#allocation5 + $0x670] sm:$0xff]
    %v1270 = vld [vmem:[#allocation5 + $0x678] sm:$0xff]
    %v1271 = vld [vmem:[#allocation5 + $0x680] sm:$0xff]
    %v1272 = vld [vmem:[#allocation5 + $0x688] sm:$0xff]
    %v1273 = vld [vmem:[#allocation5 + $0x690] sm:$0xff]
    %v1274 = vld [vmem:[#allocation5 + $0x698] sm:$0xff]
    %v1275 = vld [vmem:[#allocation5 + $0x6a0] sm:$0xff]
    %v1276 = vld [vmem:[#allocation5 + $0x6a8] sm:$0xff]
    %v1277 = vld [vmem:[#allocation5 + $0x6b0] sm:$0xff]
    %v1278 = vld [vmem:[#allocation5 + $0x6b8] sm:$0xff]
    %v1279 = vld [vmem:[#allocation5 + $0x6c0] sm:$0xff]
    %v1280 = vld [vmem:[#allocation5 + $0x6c8] sm:$0xff]
    %v1281 = vld [vmem:[#allocation5 + $0x6d0] sm:$0xff]
    %v1282 = vld [vmem:[#allocation5 + $0x6d8] sm:$0xff]
    %v1283 = vld [vmem:[#allocation5 + $0x6e0] sm:$0xff]
    %v1284 = vld [vmem:[#allocation5 + $0x6e8] sm:$0xff]
    %v1285 = vld [vmem:[#allocation5 + $0x6f0] sm:$0xff]
    %v1286 = vld [vmem:[#allocation5 + $0x6f8] sm:$0xff]
    %v1287 = vld [vmem:[#allocation5 + $0x700] sm:$0xff]
    %v1288 = vld [vmem:[#allocation5 + $0x708] sm:$0xff]
    %v1289 = vld [vmem:[#allocation5 + $0x710] sm:$0xff]
    %v1290 = vld [vmem:[#allocation5 + $0x718] sm:$0xff]
    %v1291 = vld [vmem:[#allocation5 + $0x720] sm:$0xff]
    %v1292 = vld [vmem:[#allocation5 + $0x728] sm:$0xff]
    %v1293 = vld [vmem:[#allocation5 + $0x730] sm:$0xff]
    %v1294 = vld [vmem:[#allocation5 + $0x738] sm:$0xff]
    %v1295 = vld [vmem:[#allocation5 + $0x740] sm:$0xff]
    %v1296 = vld [vmem:[#allocation5 + $0x748] sm:$0xff]
    %v1297 = vld [vmem:[#allocation5 + $0x750] sm:$0xff]
    %v1298 = vld [vmem:[#allocation5 + $0x758] sm:$0xff]
    %v1299 = vld [vmem:[#allocation5 + $0x760] sm:$0xff]
    %v1300 = vld [vmem:[#allocation5 + $0x768] sm:$0xff]
    %v1301 = vld [vmem:[#allocation5 + $0x770] sm:$0xff]
    %v1302 = vld [vmem:[#allocation5 + $0x778] sm:$0xff]
    %v1303 = vld [vmem:[#allocation5 + $0x780] sm:$0xff]
    %v1304 = vld [vmem:[#allocation5 + $0x788] sm:$0xff]
    %v1305 = vld [vmem:[#allocation5 + $0x790] sm:$0xff]
    %v1306 = vld [vmem:[#allocation5 + $0x798] sm:$0xff]
    %v1307 = vld [vmem:[#allocation5 + $0x7a0] sm:$0xff]
    %v1308 = vld [vmem:[#allocation5 + $0x7a8] sm:$0xff]
    %v1309 = vld [vmem:[#allocation5 + $0x7b0] sm:$0xff]
    %v1310 = vld [vmem:[#allocation5 + $0x7b8] sm:$0xff]
    %v1311 = vld [vmem:[#allocation5 + $0x7c0] sm:$0xff]
    %v1312 = vld [vmem:[#allocation5 + $0x7c8] sm:$0xff]
    %v1313 = vld [vmem:[#allocation5 + $0x7d0] sm:$0xff]
    %v1314 = vld [vmem:[#allocation5 + $0x7d8] sm:$0xff]
    %v1315 = vld [vmem:[#allocation5 + $0x7e0] sm:$0xff]
    %v1316 = vld [vmem:[#allocation5 + $0x7e8] sm:$0xff]
    %v1317 = vld [vmem:[#allocation5 + $0x7f0] sm:$0xff]
    %v1318 = vld [vmem:[#allocation5 + $0x7f8] sm:$0xff]
    %v1319 = vld [vmem:[%s4] sm:$0xf]
    %v1321 = vlaneseq
    %v1322 = vshrl.u32 %v1321, 7
    %v1323 = vsub.s32 0, %v1322
    %v1324 = vrot.slane %v1319, %v1323
    %v1325 = vlaneseq
    %v1326 = vshrl.u32 %v1325, 7
    %v1327 = vsub.s32 1, %v1326
    %v1328 = vrot.slane %v1319, %v1327
    %v1329 = vlaneseq
    %v1330 = vshrl.u32 %v1329, 7
    %v1331 = vsub.s32 2, %v1330
    %v1332 = vrot.slane %v1319, %v1331
    %v1333 = vlaneseq
    %v1334 = vshrl.u32 %v1333, 7
    %v1335 = vsub.s32 3, %v1334
    %v1336 = vrot.slane %v1319, %v1335
    %v1597 = vunpack.c.l.b16 %v1063
    %v1598 = vunpack.c.h.b16 %v1063
    %v1599 = vunpack.c.l.b16 %v1064
    %v1600 = vunpack.c.h.b16 %v1064
    %v1601 = vunpack.c.l.b16 %v1065
    %v1602 = vunpack.c.h.b16 %v1065
    %v1603 = vunpack.c.l.b16 %v1066
    %v1604 = vunpack.c.h.b16 %v1066
    %v1605 = vunpack.c.l.b16 %v1067
    %v1606 = vunpack.c.h.b16 %v1067
    %v1607 = vunpack.c.l.b16 %v1068
    %v1608 = vunpack.c.h.b16 %v1068
    %v1609 = vunpack.c.l.b16 %v1069
    %v1610 = vunpack.c.h.b16 %v1069
    %v1611 = vunpack.c.l.b16 %v1070
    %v1612 = vunpack.c.h.b16 %v1070
    %v1613 = vunpack.c.l.b16 %v1071
    %v1614 = vunpack.c.h.b16 %v1071
    %v1615 = vunpack.c.l.b16 %v1072
    %v1616 = vunpack.c.h.b16 %v1072
    %v1617 = vunpack.c.l.b16 %v1073
    %v1618 = vunpack.c.h.b16 %v1073
    %v1619 = vunpack.c.l.b16 %v1074
    %v1620 = vunpack.c.h.b16 %v1074
    %v1621 = vunpack.c.l.b16 %v1075
    %v1622 = vunpack.c.h.b16 %v1075
    %v1623 = vunpack.c.l.b16 %v1076
    %v1624 = vunpack.c.h.b16 %v1076
    %v1625 = vunpack.c.l.b16 %v1077
    %v1626 = vunpack.c.h.b16 %v1077
    %v1627 = vunpack.c.l.b16 %v1078
    %v1628 = vunpack.c.h.b16 %v1078
    %v1629 = vunpack.c.l.b16 %v1079
    %v1630 = vunpack.c.h.b16 %v1079
    %v1631 = vunpack.c.l.b16 %v1080
    %v1632 = vunpack.c.h.b16 %v1080
    %v1633 = vunpack.c.l.b16 %v1081
    %v1634 = vunpack.c.h.b16 %v1081
    %v1635 = vunpack.c.l.b16 %v1082
    %v1636 = vunpack.c.h.b16 %v1082
    %v1637 = vunpack.c.l.b16 %v1083
    %v1638 = vunpack.c.h.b16 %v1083
    %v1639 = vunpack.c.l.b16 %v1084
    %v1640 = vunpack.c.h.b16 %v1084
    %v1641 = vunpack.c.l.b16 %v1085
    %v1642 = vunpack.c.h.b16 %v1085
    %v1643 = vunpack.c.l.b16 %v1086
    %v1644 = vunpack.c.h.b16 %v1086
    %v1645 = vunpack.c.l.b16 %v1087
    %v1646 = vunpack.c.h.b16 %v1087
    %v1647 = vunpack.c.l.b16 %v1088
    %v1648 = vunpack.c.h.b16 %v1088
    %v1649 = vunpack.c.l.b16 %v1089
    %v1650 = vunpack.c.h.b16 %v1089
    %v1651 = vunpack.c.l.b16 %v1090
    %v1652 = vunpack.c.h.b16 %v1090
    %v1653 = vunpack.c.l.b16 %v1091
    %v1654 = vunpack.c.h.b16 %v1091
    %v1655 = vunpack.c.l.b16 %v1092
    %v1656 = vunpack.c.h.b16 %v1092
    %v1657 = vunpack.c.l.b16 %v1093
    %v1658 = vunpack.c.h.b16 %v1093
    %v1659 = vunpack.c.l.b16 %v1094
    %v1660 = vunpack.c.h.b16 %v1094
    %v1661 = vunpack.c.l.b16 %v1095
    %v1662 = vunpack.c.h.b16 %v1095
    %v1663 = vunpack.c.l.b16 %v1096
    %v1664 = vunpack.c.h.b16 %v1096
    %v1665 = vunpack.c.l.b16 %v1097
    %v1666 = vunpack.c.h.b16 %v1097
    %v1667 = vunpack.c.l.b16 %v1098
    %v1668 = vunpack.c.h.b16 %v1098
    %v1669 = vunpack.c.l.b16 %v1099
    %v1670 = vunpack.c.h.b16 %v1099
    %v1671 = vunpack.c.l.b16 %v1100
    %v1672 = vunpack.c.h.b16 %v1100
    %v1673 = vunpack.c.l.b16 %v1101
    %v1674 = vunpack.c.h.b16 %v1101
    %v1675 = vunpack.c.l.b16 %v1102
    %v1676 = vunpack.c.h.b16 %v1102
    %v1677 = vunpack.c.l.b16 %v1103
    %v1678 = vunpack.c.h.b16 %v1103
    %v1679 = vunpack.c.l.b16 %v1104
    %v1680 = vunpack.c.h.b16 %v1104
    %v1681 = vunpack.c.l.b16 %v1105
    %v1682 = vunpack.c.h.b16 %v1105
    %v1683 = vunpack.c.l.b16 %v1106
    %v1684 = vunpack.c.h.b16 %v1106
    %v1685 = vunpack.c.l.b16 %v1107
    %v1686 = vunpack.c.h.b16 %v1107
    %v1687 = vunpack.c.l.b16 %v1108
    %v1688 = vunpack.c.h.b16 %v1108
    %v1689 = vunpack.c.l.b16 %v1109
    %v1690 = vunpack.c.h.b16 %v1109
    %v1691 = vunpack.c.l.b16 %v1110
    %v1692 = vunpack.c.h.b16 %v1110
    %v1693 = vunpack.c.l.b16 %v1111
    %v1694 = vunpack.c.h.b16 %v1111
    %v1695 = vunpack.c.l.b16 %v1112
    %v1696 = vunpack.c.h.b16 %v1112
    %v1697 = vunpack.c.l.b16 %v1113
    %v1698 = vunpack.c.h.b16 %v1113
    %v1699 = vunpack.c.l.b16 %v1114
    %v1700 = vunpack.c.h.b16 %v1114
    %v1701 = vunpack.c.l.b16 %v1115
    %v1702 = vunpack.c.h.b16 %v1115
    %v1703 = vunpack.c.l.b16 %v1116
    %v1704 = vunpack.c.h.b16 %v1116
    %v1705 = vunpack.c.l.b16 %v1117
    %v1706 = vunpack.c.h.b16 %v1117
    %v1707 = vunpack.c.l.b16 %v1118
    %v1708 = vunpack.c.h.b16 %v1118
    %v1709 = vunpack.c.l.b16 %v1119
    %v1710 = vunpack.c.h.b16 %v1119
    %v1711 = vunpack.c.l.b16 %v1120
    %v1712 = vunpack.c.h.b16 %v1120
    %v1713 = vunpack.c.l.b16 %v1121
    %v1714 = vunpack.c.h.b16 %v1121
    %v1715 = vunpack.c.l.b16 %v1122
    %v1716 = vunpack.c.h.b16 %v1122
    %v1717 = vunpack.c.l.b16 %v1123
    %v1718 = vunpack.c.h.b16 %v1123
    %v1719 = vunpack.c.l.b16 %v1124
    %v1720 = vunpack.c.h.b16 %v1124
    %v1721 = vunpack.c.l.b16 %v1125
    %v1722 = vunpack.c.h.b16 %v1125
    %v1723 = vunpack.c.l.b16 %v1126
    %v1724 = vunpack.c.h.b16 %v1126
    %v1725 = vunpack.c.l.b16 %v1127
    %v1726 = vunpack.c.h.b16 %v1127
    %v1727 = vunpack.c.l.b16 %v1128
    %v1728 = vunpack.c.h.b16 %v1128
    %v1729 = vunpack.c.l.b16 %v1129
    %v1730 = vunpack.c.h.b16 %v1129
    %v1731 = vunpack.c.l.b16 %v1130
    %v1732 = vunpack.c.h.b16 %v1130
    %v1733 = vunpack.c.l.b16 %v1131
    %v1734 = vunpack.c.h.b16 %v1131
    %v1735 = vunpack.c.l.b16 %v1132
    %v1736 = vunpack.c.h.b16 %v1132
    %v1737 = vunpack.c.l.b16 %v1133
    %v1738 = vunpack.c.h.b16 %v1133
    %v1739 = vunpack.c.l.b16 %v1134
    %v1740 = vunpack.c.h.b16 %v1134
    %v1741 = vunpack.c.l.b16 %v1135
    %v1742 = vunpack.c.h.b16 %v1135
    %v1743 = vunpack.c.l.b16 %v1136
    %v1744 = vunpack.c.h.b16 %v1136
    %v1745 = vunpack.c.l.b16 %v1137
    %v1746 = vunpack.c.h.b16 %v1137
    %v1747 = vunpack.c.l.b16 %v1138
    %v1748 = vunpack.c.h.b16 %v1138
    %v1749 = vunpack.c.l.b16 %v1139
    %v1750 = vunpack.c.h.b16 %v1139
    %v1751 = vunpack.c.l.b16 %v1140
    %v1752 = vunpack.c.h.b16 %v1140
    %v1753 = vunpack.c.l.b16 %v1141
    %v1754 = vunpack.c.h.b16 %v1141
    %v1755 = vunpack.c.l.b16 %v1142
    %v1756 = vunpack.c.h.b16 %v1142
    %v1757 = vunpack.c.l.b16 %v1143
    %v1758 = vunpack.c.h.b16 %v1143
    %v1759 = vunpack.c.l.b16 %v1144
    %v1760 = vunpack.c.h.b16 %v1144
    %v1761 = vunpack.c.l.b16 %v1145
    %v1762 = vunpack.c.h.b16 %v1145
    %v1763 = vunpack.c.l.b16 %v1146
    %v1764 = vunpack.c.h.b16 %v1146
    %v1765 = vunpack.c.l.b16 %v1147
    %v1766 = vunpack.c.h.b16 %v1147
    %v1767 = vunpack.c.l.b16 %v1148
    %v1768 = vunpack.c.h.b16 %v1148
    %v1769 = vunpack.c.l.b16 %v1149
    %v1770 = vunpack.c.h.b16 %v1149
    %v1771 = vunpack.c.l.b16 %v1150
    %v1772 = vunpack.c.h.b16 %v1150
    %v1773 = vunpack.c.l.b16 %v1151
    %v1774 = vunpack.c.h.b16 %v1151
    %v1775 = vunpack.c.l.b16 %v1152
    %v1776 = vunpack.c.h.b16 %v1152
    %v1777 = vunpack.c.l.b16 %v1153
    %v1778 = vunpack.c.h.b16 %v1153
    %v1779 = vunpack.c.l.b16 %v1154
    %v1780 = vunpack.c.h.b16 %v1154
    %v1781 = vunpack.c.l.b16 %v1155
    %v1782 = vunpack.c.h.b16 %v1155
    %v1783 = vunpack.c.l.b16 %v1156
    %v1784 = vunpack.c.h.b16 %v1156
    %v1785 = vunpack.c.l.b16 %v1157
    %v1786 = vunpack.c.h.b16 %v1157
    %v1787 = vunpack.c.l.b16 %v1158
    %v1788 = vunpack.c.h.b16 %v1158
    %v1789 = vunpack.c.l.b16 %v1159
    %v1790 = vunpack.c.h.b16 %v1159
    %v1791 = vunpack.c.l.b16 %v1160
    %v1792 = vunpack.c.h.b16 %v1160
    %v1793 = vunpack.c.l.b16 %v1161
    %v1794 = vunpack.c.h.b16 %v1161
    %v1795 = vunpack.c.l.b16 %v1162
    %v1796 = vunpack.c.h.b16 %v1162
    %v1797 = vunpack.c.l.b16 %v1163
    %v1798 = vunpack.c.h.b16 %v1163
    %v1799 = vunpack.c.l.b16 %v1164
    %v1800 = vunpack.c.h.b16 %v1164
    %v1801 = vunpack.c.l.b16 %v1165
    %v1802 = vunpack.c.h.b16 %v1165
    %v1803 = vunpack.c.l.b16 %v1166
    %v1804 = vunpack.c.h.b16 %v1166
    %v1805 = vunpack.c.l.b16 %v1167
    %v1806 = vunpack.c.h.b16 %v1167
    %v1807 = vunpack.c.l.b16 %v1168
    %v1808 = vunpack.c.h.b16 %v1168
    %v1809 = vunpack.c.l.b16 %v1169
    %v1810 = vunpack.c.h.b16 %v1169
    %v1811 = vunpack.c.l.b16 %v1170
    %v1812 = vunpack.c.h.b16 %v1170
    %v1813 = vunpack.c.l.b16 %v1171
    %v1814 = vunpack.c.h.b16 %v1171
    %v1815 = vunpack.c.l.b16 %v1172
    %v1816 = vunpack.c.h.b16 %v1172
    %v1817 = vunpack.c.l.b16 %v1173
    %v1818 = vunpack.c.h.b16 %v1173
    %v1819 = vunpack.c.l.b16 %v1174
    %v1820 = vunpack.c.h.b16 %v1174
    %v1821 = vunpack.c.l.b16 %v1175
    %v1822 = vunpack.c.h.b16 %v1175
    %v1823 = vunpack.c.l.b16 %v1176
    %v1824 = vunpack.c.h.b16 %v1176
    %v1825 = vunpack.c.l.b16 %v1177
    %v1826 = vunpack.c.h.b16 %v1177
    %v1827 = vunpack.c.l.b16 %v1178
    %v1828 = vunpack.c.h.b16 %v1178
    %v1829 = vunpack.c.l.b16 %v1179
    %v1830 = vunpack.c.h.b16 %v1179
    %v1831 = vunpack.c.l.b16 %v1180
    %v1832 = vunpack.c.h.b16 %v1180
    %v1833 = vunpack.c.l.b16 %v1181
    %v1834 = vunpack.c.h.b16 %v1181
    %v1835 = vunpack.c.l.b16 %v1182
    %v1836 = vunpack.c.h.b16 %v1182
    %v1837 = vunpack.c.l.b16 %v1183
    %v1838 = vunpack.c.h.b16 %v1183
    %v1839 = vunpack.c.l.b16 %v1184
    %v1840 = vunpack.c.h.b16 %v1184
    %v1841 = vunpack.c.l.b16 %v1185
    %v1842 = vunpack.c.h.b16 %v1185
    %v1843 = vunpack.c.l.b16 %v1186
    %v1844 = vunpack.c.h.b16 %v1186
    %v1845 = vunpack.c.l.b16 %v1187
    %v1846 = vunpack.c.h.b16 %v1187
    %v1847 = vunpack.c.l.b16 %v1188
    %v1848 = vunpack.c.h.b16 %v1188
    %v1849 = vunpack.c.l.b16 %v1189
    %v1850 = vunpack.c.h.b16 %v1189
    %v1851 = vunpack.c.l.b16 %v1190
    %v1852 = vunpack.c.h.b16 %v1190
    %v1853 = vunpack.c.l.b16 %v1191
    %v1854 = vunpack.c.h.b16 %v1191
    %v1855 = vunpack.c.l.b16 %v1192
    %v1856 = vunpack.c.h.b16 %v1192
    %v1857 = vunpack.c.l.b16 %v1193
    %v1858 = vunpack.c.h.b16 %v1193
    %v1859 = vunpack.c.l.b16 %v1194
    %v1860 = vunpack.c.h.b16 %v1194
    %v1861 = vunpack.c.l.b16 %v1195
    %v1862 = vunpack.c.h.b16 %v1195
    %v1863 = vunpack.c.l.b16 %v1196
    %v1864 = vunpack.c.h.b16 %v1196
    %v1865 = vunpack.c.l.b16 %v1197
    %v1866 = vunpack.c.h.b16 %v1197
    %v1867 = vunpack.c.l.b16 %v1198
    %v1868 = vunpack.c.h.b16 %v1198
    %v1869 = vunpack.c.l.b16 %v1199
    %v1870 = vunpack.c.h.b16 %v1199
    %v1871 = vunpack.c.l.b16 %v1200
    %v1872 = vunpack.c.h.b16 %v1200
    %v1873 = vunpack.c.l.b16 %v1201
    %v1874 = vunpack.c.h.b16 %v1201
    %v1875 = vunpack.c.l.b16 %v1202
    %v1876 = vunpack.c.h.b16 %v1202
    %v1877 = vunpack.c.l.b16 %v1203
    %v1878 = vunpack.c.h.b16 %v1203
    %v1879 = vunpack.c.l.b16 %v1204
    %v1880 = vunpack.c.h.b16 %v1204
    %v1881 = vunpack.c.l.b16 %v1205
    %v1882 = vunpack.c.h.b16 %v1205
    %v1883 = vunpack.c.l.b16 %v1206
    %v1884 = vunpack.c.h.b16 %v1206
    %v1885 = vunpack.c.l.b16 %v1207
    %v1886 = vunpack.c.h.b16 %v1207
    %v1887 = vunpack.c.l.b16 %v1208
    %v1888 = vunpack.c.h.b16 %v1208
    %v1889 = vunpack.c.l.b16 %v1209
    %v1890 = vunpack.c.h.b16 %v1209
    %v1891 = vunpack.c.l.b16 %v1210
    %v1892 = vunpack.c.h.b16 %v1210
    %v1893 = vunpack.c.l.b16 %v1211
    %v1894 = vunpack.c.h.b16 %v1211
    %v1895 = vunpack.c.l.b16 %v1212
    %v1896 = vunpack.c.h.b16 %v1212
    %v1897 = vunpack.c.l.b16 %v1213
    %v1898 = vunpack.c.h.b16 %v1213
    %v1899 = vunpack.c.l.b16 %v1214
    %v1900 = vunpack.c.h.b16 %v1214
    %v1901 = vunpack.c.l.b16 %v1215
    %v1902 = vunpack.c.h.b16 %v1215
    %v1903 = vunpack.c.l.b16 %v1216
    %v1904 = vunpack.c.h.b16 %v1216
    %v1905 = vunpack.c.l.b16 %v1217
    %v1906 = vunpack.c.h.b16 %v1217
    %v1907 = vunpack.c.l.b16 %v1218
    %v1908 = vunpack.c.h.b16 %v1218
    %v1909 = vunpack.c.l.b16 %v1219
    %v1910 = vunpack.c.h.b16 %v1219
    %v1911 = vunpack.c.l.b16 %v1220
    %v1912 = vunpack.c.h.b16 %v1220
    %v1913 = vunpack.c.l.b16 %v1221
    %v1914 = vunpack.c.h.b16 %v1221
    %v1915 = vunpack.c.l.b16 %v1222
    %v1916 = vunpack.c.h.b16 %v1222
    %v1917 = vunpack.c.l.b16 %v1223
    %v1918 = vunpack.c.h.b16 %v1223
    %v1919 = vunpack.c.l.b16 %v1224
    %v1920 = vunpack.c.h.b16 %v1224
    %v1921 = vunpack.c.l.b16 %v1225
    %v1922 = vunpack.c.h.b16 %v1225
    %v1923 = vunpack.c.l.b16 %v1226
    %v1924 = vunpack.c.h.b16 %v1226
    %v1925 = vunpack.c.l.b16 %v1227
    %v1926 = vunpack.c.h.b16 %v1227
    %v1927 = vunpack.c.l.b16 %v1228
    %v1928 = vunpack.c.h.b16 %v1228
    %v1929 = vunpack.c.l.b16 %v1229
    %v1930 = vunpack.c.h.b16 %v1229
    %v1931 = vunpack.c.l.b16 %v1230
    %v1932 = vunpack.c.h.b16 %v1230
    %v1933 = vunpack.c.l.b16 %v1231
    %v1934 = vunpack.c.h.b16 %v1231
    %v1935 = vunpack.c.l.b16 %v1232
    %v1936 = vunpack.c.h.b16 %v1232
    %v1937 = vunpack.c.l.b16 %v1233
    %v1938 = vunpack.c.h.b16 %v1233
    %v1939 = vunpack.c.l.b16 %v1234
    %v1940 = vunpack.c.h.b16 %v1234
    %v1941 = vunpack.c.l.b16 %v1235
    %v1942 = vunpack.c.h.b16 %v1235
    %v1943 = vunpack.c.l.b16 %v1236
    %v1944 = vunpack.c.h.b16 %v1236
    %v1945 = vunpack.c.l.b16 %v1237
    %v1946 = vunpack.c.h.b16 %v1237
    %v1947 = vunpack.c.l.b16 %v1238
    %v1948 = vunpack.c.h.b16 %v1238
    %v1949 = vunpack.c.l.b16 %v1239
    %v1950 = vunpack.c.h.b16 %v1239
    %v1951 = vunpack.c.l.b16 %v1240
    %v1952 = vunpack.c.h.b16 %v1240
    %v1953 = vunpack.c.l.b16 %v1241
    %v1954 = vunpack.c.h.b16 %v1241
    %v1955 = vunpack.c.l.b16 %v1242
    %v1956 = vunpack.c.h.b16 %v1242
    %v1957 = vunpack.c.l.b16 %v1243
    %v1958 = vunpack.c.h.b16 %v1243
    %v1959 = vunpack.c.l.b16 %v1244
    %v1960 = vunpack.c.h.b16 %v1244
    %v1961 = vunpack.c.l.b16 %v1245
    %v1962 = vunpack.c.h.b16 %v1245
    %v1963 = vunpack.c.l.b16 %v1246
    %v1964 = vunpack.c.h.b16 %v1246
    %v1965 = vunpack.c.l.b16 %v1247
    %v1966 = vunpack.c.h.b16 %v1247
    %v1967 = vunpack.c.l.b16 %v1248
    %v1968 = vunpack.c.h.b16 %v1248
    %v1969 = vunpack.c.l.b16 %v1249
    %v1970 = vunpack.c.h.b16 %v1249
    %v1971 = vunpack.c.l.b16 %v1250
    %v1972 = vunpack.c.h.b16 %v1250
    %v1973 = vunpack.c.l.b16 %v1251
    %v1974 = vunpack.c.h.b16 %v1251
    %v1975 = vunpack.c.l.b16 %v1252
    %v1976 = vunpack.c.h.b16 %v1252
    %v1977 = vunpack.c.l.b16 %v1253
    %v1978 = vunpack.c.h.b16 %v1253
    %v1979 = vunpack.c.l.b16 %v1254
    %v1980 = vunpack.c.h.b16 %v1254
    %v1981 = vunpack.c.l.b16 %v1255
    %v1982 = vunpack.c.h.b16 %v1255
    %v1983 = vunpack.c.l.b16 %v1256
    %v1984 = vunpack.c.h.b16 %v1256
    %v1985 = vunpack.c.l.b16 %v1257
    %v1986 = vunpack.c.h.b16 %v1257
    %v1987 = vunpack.c.l.b16 %v1258
    %v1988 = vunpack.c.h.b16 %v1258
    %v1989 = vunpack.c.l.b16 %v1259
    %v1990 = vunpack.c.h.b16 %v1259
    %v1991 = vunpack.c.l.b16 %v1260
    %v1992 = vunpack.c.h.b16 %v1260
    %v1993 = vunpack.c.l.b16 %v1261
    %v1994 = vunpack.c.h.b16 %v1261
    %v1995 = vunpack.c.l.b16 %v1262
    %v1996 = vunpack.c.h.b16 %v1262
    %v1997 = vunpack.c.l.b16 %v1263
    %v1998 = vunpack.c.h.b16 %v1263
    %v1999 = vunpack.c.l.b16 %v1264
    %v2000 = vunpack.c.h.b16 %v1264
    %v2001 = vunpack.c.l.b16 %v1265
    %v2002 = vunpack.c.h.b16 %v1265
    %v2003 = vunpack.c.l.b16 %v1266
    %v2004 = vunpack.c.h.b16 %v1266
    %v2005 = vunpack.c.l.b16 %v1267
    %v2006 = vunpack.c.h.b16 %v1267
    %v2007 = vunpack.c.l.b16 %v1268
    %v2008 = vunpack.c.h.b16 %v1268
    %v2009 = vunpack.c.l.b16 %v1269
    %v2010 = vunpack.c.h.b16 %v1269
    %v2011 = vunpack.c.l.b16 %v1270
    %v2012 = vunpack.c.h.b16 %v1270
    %v2013 = vunpack.c.l.b16 %v1271
    %v2014 = vunpack.c.h.b16 %v1271
    %v2015 = vunpack.c.l.b16 %v1272
    %v2016 = vunpack.c.h.b16 %v1272
    %v2017 = vunpack.c.l.b16 %v1273
    %v2018 = vunpack.c.h.b16 %v1273
    %v2019 = vunpack.c.l.b16 %v1274
    %v2020 = vunpack.c.h.b16 %v1274
    %v2021 = vunpack.c.l.b16 %v1275
    %v2022 = vunpack.c.h.b16 %v1275
    %v2023 = vunpack.c.l.b16 %v1276
    %v2024 = vunpack.c.h.b16 %v1276
    %v2025 = vunpack.c.l.b16 %v1277
    %v2026 = vunpack.c.h.b16 %v1277
    %v2027 = vunpack.c.l.b16 %v1278
    %v2028 = vunpack.c.h.b16 %v1278
    %v2029 = vunpack.c.l.b16 %v1279
    %v2030 = vunpack.c.h.b16 %v1279
    %v2031 = vunpack.c.l.b16 %v1280
    %v2032 = vunpack.c.h.b16 %v1280
    %v2033 = vunpack.c.l.b16 %v1281
    %v2034 = vunpack.c.h.b16 %v1281
    %v2035 = vunpack.c.l.b16 %v1282
    %v2036 = vunpack.c.h.b16 %v1282
    %v2037 = vunpack.c.l.b16 %v1283
    %v2038 = vunpack.c.h.b16 %v1283
    %v2039 = vunpack.c.l.b16 %v1284
    %v2040 = vunpack.c.h.b16 %v1284
    %v2041 = vunpack.c.l.b16 %v1285
    %v2042 = vunpack.c.h.b16 %v1285
    %v2043 = vunpack.c.l.b16 %v1286
    %v2044 = vunpack.c.h.b16 %v1286
    %v2045 = vunpack.c.l.b16 %v1287
    %v2046 = vunpack.c.h.b16 %v1287
    %v2047 = vunpack.c.l.b16 %v1288
    %v2048 = vunpack.c.h.b16 %v1288
    %v2049 = vunpack.c.l.b16 %v1289
    %v2050 = vunpack.c.h.b16 %v1289
    %v2051 = vunpack.c.l.b16 %v1290
    %v2052 = vunpack.c.h.b16 %v1290
    %v2053 = vunpack.c.l.b16 %v1291
    %v2054 = vunpack.c.h.b16 %v1291
    %v2055 = vunpack.c.l.b16 %v1292
    %v2056 = vunpack.c.h.b16 %v1292
    %v2057 = vunpack.c.l.b16 %v1293
    %v2058 = vunpack.c.h.b16 %v1293
    %v2059 = vunpack.c.l.b16 %v1294
    %v2060 = vunpack.c.h.b16 %v1294
    %v2061 = vunpack.c.l.b16 %v1295
    %v2062 = vunpack.c.h.b16 %v1295
    %v2063 = vunpack.c.l.b16 %v1296
    %v2064 = vunpack.c.h.b16 %v1296
    %v2065 = vunpack.c.l.b16 %v1297
    %v2066 = vunpack.c.h.b16 %v1297
    %v2067 = vunpack.c.l.b16 %v1298
    %v2068 = vunpack.c.h.b16 %v1298
    %v2069 = vunpack.c.l.b16 %v1299
    %v2070 = vunpack.c.h.b16 %v1299
    %v2071 = vunpack.c.l.b16 %v1300
    %v2072 = vunpack.c.h.b16 %v1300
    %v2073 = vunpack.c.l.b16 %v1301
    %v2074 = vunpack.c.h.b16 %v1301
    %v2075 = vunpack.c.l.b16 %v1302
    %v2076 = vunpack.c.h.b16 %v1302
    %v2077 = vunpack.c.l.b16 %v1303
    %v2078 = vunpack.c.h.b16 %v1303
    %v2079 = vunpack.c.l.b16 %v1304
    %v2080 = vunpack.c.h.b16 %v1304
    %v2081 = vunpack.c.l.b16 %v1305
    %v2082 = vunpack.c.h.b16 %v1305
    %v2083 = vunpack.c.l.b16 %v1306
    %v2084 = vunpack.c.h.b16 %v1306
    %v2085 = vunpack.c.l.b16 %v1307
    %v2086 = vunpack.c.h.b16 %v1307
    %v2087 = vunpack.c.l.b16 %v1308
    %v2088 = vunpack.c.h.b16 %v1308
    %v2089 = vunpack.c.l.b16 %v1309
    %v2090 = vunpack.c.h.b16 %v1309
    %v2091 = vunpack.c.l.b16 %v1310
    %v2092 = vunpack.c.h.b16 %v1310
    %v2093 = vunpack.c.l.b16 %v1311
    %v2094 = vunpack.c.h.b16 %v1311
    %v2095 = vunpack.c.l.b16 %v1312
    %v2096 = vunpack.c.h.b16 %v1312
    %v2097 = vunpack.c.l.b16 %v1313
    %v2098 = vunpack.c.h.b16 %v1313
    %v2099 = vunpack.c.l.b16 %v1314
    %v2100 = vunpack.c.h.b16 %v1314
    %v2101 = vunpack.c.l.b16 %v1315
    %v2102 = vunpack.c.h.b16 %v1315
    %v2103 = vunpack.c.l.b16 %v1316
    %v2104 = vunpack.c.h.b16 %v1316
    %v2105 = vunpack.c.l.b16 %v1317
    %v2106 = vunpack.c.h.b16 %v1317
    %v2107 = vunpack.c.l.b16 %v1318
    %v2108 = vunpack.c.h.b16 %v1318
    %v2109 = vpack.c.b16 %v1601, %v1597
    %v2110 = vpack.c.b16 %v1602, %v1598
    %v2111 = vpack.c.b16 %v1603, %v1599
    %v2112 = vpack.c.b16 %v1604, %v1600
    %v2113 = vpack.c.b16 %v1609, %v1605
    %v2114 = vpack.c.b16 %v1610, %v1606
    %v2115 = vpack.c.b16 %v1611, %v1607
    %v2116 = vpack.c.b16 %v1612, %v1608
    %v2117 = vpack.c.b16 %v1617, %v1613
    %v2118 = vpack.c.b16 %v1618, %v1614
    %v2119 = vpack.c.b16 %v1619, %v1615
    %v2120 = vpack.c.b16 %v1620, %v1616
    %v2121 = vpack.c.b16 %v1625, %v1621
    %v2122 = vpack.c.b16 %v1626, %v1622
    %v2123 = vpack.c.b16 %v1627, %v1623
    %v2124 = vpack.c.b16 %v1628, %v1624
    %v2125 = vpack.c.b16 %v1633, %v1629
    %v2126 = vpack.c.b16 %v1634, %v1630
    %v2127 = vpack.c.b16 %v1635, %v1631
    %v2128 = vpack.c.b16 %v1636, %v1632
    %v2129 = vpack.c.b16 %v1641, %v1637
    %v2130 = vpack.c.b16 %v1642, %v1638
    %v2131 = vpack.c.b16 %v1643, %v1639
    %v2132 = vpack.c.b16 %v1644, %v1640
    %v2133 = vpack.c.b16 %v1649, %v1645
    %v2134 = vpack.c.b16 %v1650, %v1646
    %v2135 = vpack.c.b16 %v1651, %v1647
    %v2136 = vpack.c.b16 %v1652, %v1648
    %v2137 = vpack.c.b16 %v1657, %v1653
    %v2138 = vpack.c.b16 %v1658, %v1654
    %v2139 = vpack.c.b16 %v1659, %v1655
    %v2140 = vpack.c.b16 %v1660, %v1656
    %v2141 = vpack.c.b16 %v1665, %v1661
    %v2142 = vpack.c.b16 %v1666, %v1662
    %v2143 = vpack.c.b16 %v1667, %v1663
    %v2144 = vpack.c.b16 %v1668, %v1664
    %v2145 = vpack.c.b16 %v1673, %v1669
    %v2146 = vpack.c.b16 %v1674, %v1670
    %v2147 = vpack.c.b16 %v1675, %v1671
    %v2148 = vpack.c.b16 %v1676, %v1672
    %v2149 = vpack.c.b16 %v1681, %v1677
    %v2150 = vpack.c.b16 %v1682, %v1678
    %v2151 = vpack.c.b16 %v1683, %v1679
    %v2152 = vpack.c.b16 %v1684, %v1680
    %v2153 = vpack.c.b16 %v1689, %v1685
    %v2154 = vpack.c.b16 %v1690, %v1686
    %v2155 = vpack.c.b16 %v1691, %v1687
    %v2156 = vpack.c.b16 %v1692, %v1688
    %v2157 = vpack.c.b16 %v1697, %v1693
    %v2158 = vpack.c.b16 %v1698, %v1694
    %v2159 = vpack.c.b16 %v1699, %v1695
    %v2160 = vpack.c.b16 %v1700, %v1696
    %v2161 = vpack.c.b16 %v1705, %v1701
    %v2162 = vpack.c.b16 %v1706, %v1702
    %v2163 = vpack.c.b16 %v1707, %v1703
    %v2164 = vpack.c.b16 %v1708, %v1704
    %v2165 = vpack.c.b16 %v1713, %v1709
    %v2166 = vpack.c.b16 %v1714, %v1710
    %v2167 = vpack.c.b16 %v1715, %v1711
    %v2168 = vpack.c.b16 %v1716, %v1712
    %v2169 = vpack.c.b16 %v1721, %v1717
    %v2170 = vpack.c.b16 %v1722, %v1718
    %v2171 = vpack.c.b16 %v1723, %v1719
    %v2172 = vpack.c.b16 %v1724, %v1720
    %v2173 = vpack.c.b16 %v1729, %v1725
    %v2174 = vpack.c.b16 %v1730, %v1726
    %v2175 = vpack.c.b16 %v1731, %v1727
    %v2176 = vpack.c.b16 %v1732, %v1728
    %v2177 = vpack.c.b16 %v1737, %v1733
    %v2178 = vpack.c.b16 %v1738, %v1734
    %v2179 = vpack.c.b16 %v1739, %v1735
    %v2180 = vpack.c.b16 %v1740, %v1736
    %v2181 = vpack.c.b16 %v1745, %v1741
    %v2182 = vpack.c.b16 %v1746, %v1742
    %v2183 = vpack.c.b16 %v1747, %v1743
    %v2184 = vpack.c.b16 %v1748, %v1744
    %v2185 = vpack.c.b16 %v1753, %v1749
    %v2186 = vpack.c.b16 %v1754, %v1750
    %v2187 = vpack.c.b16 %v1755, %v1751
    %v2188 = vpack.c.b16 %v1756, %v1752
    %v2189 = vpack.c.b16 %v1761, %v1757
    %v2190 = vpack.c.b16 %v1762, %v1758
    %v2191 = vpack.c.b16 %v1763, %v1759
    %v2192 = vpack.c.b16 %v1764, %v1760
    %v2193 = vpack.c.b16 %v1769, %v1765
    %v2194 = vpack.c.b16 %v1770, %v1766
    %v2195 = vpack.c.b16 %v1771, %v1767
    %v2196 = vpack.c.b16 %v1772, %v1768
    %v2197 = vpack.c.b16 %v1777, %v1773
    %v2198 = vpack.c.b16 %v1778, %v1774
    %v2199 = vpack.c.b16 %v1779, %v1775
    %v2200 = vpack.c.b16 %v1780, %v1776
    %v2201 = vpack.c.b16 %v1785, %v1781
    %v2202 = vpack.c.b16 %v1786, %v1782
    %v2203 = vpack.c.b16 %v1787, %v1783
    %v2204 = vpack.c.b16 %v1788, %v1784
    %v2205 = vpack.c.b16 %v1793, %v1789
    %v2206 = vpack.c.b16 %v1794, %v1790
    %v2207 = vpack.c.b16 %v1795, %v1791
    %v2208 = vpack.c.b16 %v1796, %v1792
    %v2209 = vpack.c.b16 %v1801, %v1797
    %v2210 = vpack.c.b16 %v1802, %v1798
    %v2211 = vpack.c.b16 %v1803, %v1799
    %v2212 = vpack.c.b16 %v1804, %v1800
    %v2213 = vpack.c.b16 %v1809, %v1805
    %v2214 = vpack.c.b16 %v1810, %v1806
    %v2215 = vpack.c.b16 %v1811, %v1807
    %v2216 = vpack.c.b16 %v1812, %v1808
    %v2217 = vpack.c.b16 %v1817, %v1813
    %v2218 = vpack.c.b16 %v1818, %v1814
    %v2219 = vpack.c.b16 %v1819, %v1815
    %v2220 = vpack.c.b16 %v1820, %v1816
    %v2221 = vpack.c.b16 %v1825, %v1821
    %v2222 = vpack.c.b16 %v1826, %v1822
    %v2223 = vpack.c.b16 %v1827, %v1823
    %v2224 = vpack.c.b16 %v1828, %v1824
    %v2225 = vpack.c.b16 %v1833, %v1829
    %v2226 = vpack.c.b16 %v1834, %v1830
    %v2227 = vpack.c.b16 %v1835, %v1831
    %v2228 = vpack.c.b16 %v1836, %v1832
    %v2229 = vpack.c.b16 %v1841, %v1837
    %v2230 = vpack.c.b16 %v1842, %v1838
    %v2231 = vpack.c.b16 %v1843, %v1839
    %v2232 = vpack.c.b16 %v1844, %v1840
    %v2233 = vpack.c.b16 %v1849, %v1845
    %v2234 = vpack.c.b16 %v1850, %v1846
    %v2235 = vpack.c.b16 %v1851, %v1847
    %v2236 = vpack.c.b16 %v1852, %v1848
    %v2237 = vpack.c.b16 %v1857, %v1853
    %v2238 = vpack.c.b16 %v1858, %v1854
    %v2239 = vpack.c.b16 %v1859, %v1855
    %v2240 = vpack.c.b16 %v1860, %v1856
    %v2241 = vpack.c.b16 %v1865, %v1861
    %v2242 = vpack.c.b16 %v1866, %v1862
    %v2243 = vpack.c.b16 %v1867, %v1863
    %v2244 = vpack.c.b16 %v1868, %v1864
    %v2245 = vpack.c.b16 %v1873, %v1869
    %v2246 = vpack.c.b16 %v1874, %v1870
    %v2247 = vpack.c.b16 %v1875, %v1871
    %v2248 = vpack.c.b16 %v1876, %v1872
    %v2249 = vpack.c.b16 %v1881, %v1877
    %v2250 = vpack.c.b16 %v1882, %v1878
    %v2251 = vpack.c.b16 %v1883, %v1879
    %v2252 = vpack.c.b16 %v1884, %v1880
    %v2253 = vpack.c.b16 %v1889, %v1885
    %v2254 = vpack.c.b16 %v1890, %v1886
    %v2255 = vpack.c.b16 %v1891, %v1887
    %v2256 = vpack.c.b16 %v1892, %v1888
    %v2257 = vpack.c.b16 %v1897, %v1893
    %v2258 = vpack.c.b16 %v1898, %v1894
    %v2259 = vpack.c.b16 %v1899, %v1895
    %v2260 = vpack.c.b16 %v1900, %v1896
    %v2261 = vpack.c.b16 %v1905, %v1901
    %v2262 = vpack.c.b16 %v1906, %v1902
    %v2263 = vpack.c.b16 %v1907, %v1903
    %v2264 = vpack.c.b16 %v1908, %v1904
    %v2265 = vpack.c.b16 %v1913, %v1909
    %v2266 = vpack.c.b16 %v1914, %v1910
    %v2267 = vpack.c.b16 %v1915, %v1911
    %v2268 = vpack.c.b16 %v1916, %v1912
    %v2269 = vpack.c.b16 %v1921, %v1917
    %v2270 = vpack.c.b16 %v1922, %v1918
    %v2271 = vpack.c.b16 %v1923, %v1919
    %v2272 = vpack.c.b16 %v1924, %v1920
    %v2273 = vpack.c.b16 %v1929, %v1925
    %v2274 = vpack.c.b16 %v1930, %v1926
    %v2275 = vpack.c.b16 %v1931, %v1927
    %v2276 = vpack.c.b16 %v1932, %v1928
    %v2277 = vpack.c.b16 %v1937, %v1933
    %v2278 = vpack.c.b16 %v1938, %v1934
    %v2279 = vpack.c.b16 %v1939, %v1935
    %v2280 = vpack.c.b16 %v1940, %v1936
    %v2281 = vpack.c.b16 %v1945, %v1941
    %v2282 = vpack.c.b16 %v1946, %v1942
    %v2283 = vpack.c.b16 %v1947, %v1943
    %v2284 = vpack.c.b16 %v1948, %v1944
    %v2285 = vpack.c.b16 %v1953, %v1949
    %v2286 = vpack.c.b16 %v1954, %v1950
    %v2287 = vpack.c.b16 %v1955, %v1951
    %v2288 = vpack.c.b16 %v1956, %v1952
    %v2289 = vpack.c.b16 %v1961, %v1957
    %v2290 = vpack.c.b16 %v1962, %v1958
    %v2291 = vpack.c.b16 %v1963, %v1959
    %v2292 = vpack.c.b16 %v1964, %v1960
    %v2293 = vpack.c.b16 %v1969, %v1965
    %v2294 = vpack.c.b16 %v1970, %v1966
    %v2295 = vpack.c.b16 %v1971, %v1967
    %v2296 = vpack.c.b16 %v1972, %v1968
    %v2297 = vpack.c.b16 %v1977, %v1973
    %v2298 = vpack.c.b16 %v1978, %v1974
    %v2299 = vpack.c.b16 %v1979, %v1975
    %v2300 = vpack.c.b16 %v1980, %v1976
    %v2301 = vpack.c.b16 %v1985, %v1981
    %v2302 = vpack.c.b16 %v1986, %v1982
    %v2303 = vpack.c.b16 %v1987, %v1983
    %v2304 = vpack.c.b16 %v1988, %v1984
    %v2305 = vpack.c.b16 %v1993, %v1989
    %v2306 = vpack.c.b16 %v1994, %v1990
    %v2307 = vpack.c.b16 %v1995, %v1991
    %v2308 = vpack.c.b16 %v1996, %v1992
    %v2309 = vpack.c.b16 %v2001, %v1997
    %v2310 = vpack.c.b16 %v2002, %v1998
    %v2311 = vpack.c.b16 %v2003, %v1999
    %v2312 = vpack.c.b16 %v2004, %v2000
    %v2313 = vpack.c.b16 %v2009, %v2005
    %v2314 = vpack.c.b16 %v2010, %v2006
    %v2315 = vpack.c.b16 %v2011, %v2007
    %v2316 = vpack.c.b16 %v2012, %v2008
    %v2317 = vpack.c.b16 %v2017, %v2013
    %v2318 = vpack.c.b16 %v2018, %v2014
    %v2319 = vpack.c.b16 %v2019, %v2015
    %v2320 = vpack.c.b16 %v2020, %v2016
    %v2321 = vpack.c.b16 %v2025, %v2021
    %v2322 = vpack.c.b16 %v2026, %v2022
    %v2323 = vpack.c.b16 %v2027, %v2023
    %v2324 = vpack.c.b16 %v2028, %v2024
    %v2325 = vpack.c.b16 %v2033, %v2029
    %v2326 = vpack.c.b16 %v2034, %v2030
    %v2327 = vpack.c.b16 %v2035, %v2031
    %v2328 = vpack.c.b16 %v2036, %v2032
    %v2329 = vpack.c.b16 %v2041, %v2037
    %v2330 = vpack.c.b16 %v2042, %v2038
    %v2331 = vpack.c.b16 %v2043, %v2039
    %v2332 = vpack.c.b16 %v2044, %v2040
    %v2333 = vpack.c.b16 %v2049, %v2045
    %v2334 = vpack.c.b16 %v2050, %v2046
    %v2335 = vpack.c.b16 %v2051, %v2047
    %v2336 = vpack.c.b16 %v2052, %v2048
    %v2337 = vpack.c.b16 %v2057, %v2053
    %v2338 = vpack.c.b16 %v2058, %v2054
    %v2339 = vpack.c.b16 %v2059, %v2055
    %v2340 = vpack.c.b16 %v2060, %v2056
    %v2341 = vpack.c.b16 %v2065, %v2061
    %v2342 = vpack.c.b16 %v2066, %v2062
    %v2343 = vpack.c.b16 %v2067, %v2063
    %v2344 = vpack.c.b16 %v2068, %v2064
    %v2345 = vpack.c.b16 %v2073, %v2069
    %v2346 = vpack.c.b16 %v2074, %v2070
    %v2347 = vpack.c.b16 %v2075, %v2071
    %v2348 = vpack.c.b16 %v2076, %v2072
    %v2349 = vpack.c.b16 %v2081, %v2077
    %v2350 = vpack.c.b16 %v2082, %v2078
    %v2351 = vpack.c.b16 %v2083, %v2079
    %v2352 = vpack.c.b16 %v2084, %v2080
    %v2353 = vpack.c.b16 %v2089, %v2085
    %v2354 = vpack.c.b16 %v2090, %v2086
    %v2355 = vpack.c.b16 %v2091, %v2087
    %v2356 = vpack.c.b16 %v2092, %v2088
    %v2357 = vpack.c.b16 %v2097, %v2093
    %v2358 = vpack.c.b16 %v2098, %v2094
    %v2359 = vpack.c.b16 %v2099, %v2095
    %v2360 = vpack.c.b16 %v2100, %v2096
    %v2361 = vpack.c.b16 %v2105, %v2101
    %v2362 = vpack.c.b16 %v2106, %v2102
    %v2363 = vpack.c.b16 %v2107, %v2103
    %v2364 = vpack.c.b16 %v2108, %v2104
    %2621 = vmatprep.subr.bf16.mxu0 %v2110
    %2622 = vmatpush1.bf16.msra.mxu0 %v2109
    %2623 = vmatprep.subr.bf16.mxu0 %v2114
    %2624 = vmatpush1.bf16.msra.mxu0 %v2113
    %2625 = vmatprep.subr.bf16.mxu0 %v2118
    %2626 = vmatpush1.bf16.msra.mxu0 %v2117
    %2627 = vmatprep.subr.bf16.mxu0 %v2122
    %2628 = vmatpush1.bf16.msra.mxu0 %v2121
    %2629 = vmatprep.subr.bf16.mxu0 %v2126
    %2630 = vmatpush1.bf16.msra.mxu0 %v2125
    %2631 = vmatprep.subr.bf16.mxu0 %v2130
    %2632 = vmatpush1.bf16.msra.mxu0 %v2129
    %2633 = vmatprep.subr.bf16.mxu0 %v2134
    %2634 = vmatpush1.bf16.msra.mxu0 %v2133
    %2635 = vmatprep.subr.bf16.mxu0 %v2138
    %2636 = vmatpush1.bf16.msra.mxu0 %v2137
    %2637 = vmatprep.subr.bf16.mxu0 %v2142
    %2638 = vmatpush1.bf16.msra.mxu0 %v2141
    %2639 = vmatprep.subr.bf16.mxu0 %v2146
    %2640 = vmatpush1.bf16.msra.mxu0 %v2145
    %2641 = vmatprep.subr.bf16.mxu0 %v2150
    %2642 = vmatpush1.bf16.msra.mxu0 %v2149
    %2643 = vmatprep.subr.bf16.mxu0 %v2154
    %2644 = vmatpush1.bf16.msra.mxu0 %v2153
    %2645 = vmatprep.subr.bf16.mxu0 %v2158
    %2646 = vmatpush1.bf16.msra.mxu0 %v2157
    %2647 = vmatprep.subr.bf16.mxu0 %v2162
    %2648 = vmatpush1.bf16.msra.mxu0 %v2161
    %2649 = vmatprep.subr.bf16.mxu0 %v2166
    %2650 = vmatpush1.bf16.msra.mxu0 %v2165
    %2651 = vmatprep.subr.bf16.mxu0 %v2170
    %2652 = vmatpush1.bf16.msra.mxu0 %v2169
    %2653 = vmatprep.mubr.bf16.mxu0 %v1056
    %2654 = vmatmul.mubr.bf16.gmra.mrb[0].mxu0 %v1055
    %v2655 = vpop.f32.mrb[0].mxu0
    %v2656 = vadd.f32 %v1324, %v2655
    %v2657 = vpop.f32.mrb[0].mxu0
    %v2658 = vadd.f32 %v1328, %v2657
    %v2659 = vpop.f32.mrb[0].mxu0
    %v2660 = vpop.f32.mrb[0].mxu0
    %2661 = vdwg.mxu0
    %2662 = vmatprep.subr.bf16.mxu0 %v2174
    %2663 = vmatpush1.bf16.msra.mxu0 %v2173
    %2664 = vmatprep.subr.bf16.mxu0 %v2178
    %2665 = vmatpush1.bf16.msra.mxu0 %v2177
    %2666 = vmatprep.subr.bf16.mxu0 %v2182
    %2667 = vmatpush1.bf16.msra.mxu0 %v2181
    %2668 = vmatprep.subr.bf16.mxu0 %v2186
    %2669 = vmatpush1.bf16.msra.mxu0 %v2185
    %2670 = vmatprep.subr.bf16.mxu0 %v2190
    %2671 = vmatpush1.bf16.msra.mxu0 %v2189
    %2672 = vmatprep.subr.bf16.mxu0 %v2194
    %2673 = vmatpush1.bf16.msra.mxu0 %v2193
    %2674 = vmatprep.subr.bf16.mxu0 %v2198
    %2675 = vmatpush1.bf16.msra.mxu0 %v2197
    %2676 = vmatprep.subr.bf16.mxu0 %v2202
    %2677 = vmatpush1.bf16.msra.mxu0 %v2201
    %2678 = vmatprep.subr.bf16.mxu0 %v2206
    %2679 = vmatpush1.bf16.msra.mxu0 %v2205
    %2680 = vmatprep.subr.bf16.mxu0 %v2210
    %2681 = vmatpush1.bf16.msra.mxu0 %v2209
    %2682 = vmatprep.subr.bf16.mxu0 %v2214
    %2683 = vmatpush1.bf16.msra.mxu0 %v2213
    %2684 = vmatprep.subr.bf16.mxu0 %v2218
    %2685 = vmatpush1.bf16.msra.mxu0 %v2217
    %2686 = vmatprep.subr.bf16.mxu0 %v2222
    %2687 = vmatpush1.bf16.msra.mxu0 %v2221
    %2688 = vmatprep.subr.bf16.mxu0 %v2226
    %2689 = vmatpush1.bf16.msra.mxu0 %v2225
    %2690 = vmatprep.subr.bf16.mxu0 %v2230
    %2691 = vmatpush1.bf16.msra.mxu0 %v2229
    %2692 = vmatprep.subr.bf16.mxu0 %v2234
    %2693 = vmatpush1.bf16.msra.mxu0 %v2233
    %2694 = vmatprep.mubr.bf16.mxu0 %v1058
    %2695 = vmatmul.mubr.bf16.gmra.mrb[0].mxu0 %v1057
    %v2696 = vpop.f32.mrb[0].mxu0
    %v2697 = vadd.f32 %v2656, %v2696
    %v2698 = vpop.f32.mrb[0].mxu0
    %v2699 = vadd.f32 %v2658, %v2698
    %v2700 = vpop.f32.mrb[0].mxu0
    %v2701 = vpop.f32.mrb[0].mxu0
    %2702 = vdwg.mxu0
    %2703 = vmatprep.subr.bf16.mxu0 %v2238
    %2704 = vmatpush1.bf16.msra.mxu0 %v2237
    %2705 = vmatprep.subr.bf16.mxu0 %v2242
    %2706 = vmatpush1.bf16.msra.mxu0 %v2241
    %2707 = vmatprep.subr.bf16.mxu0 %v2246
    %2708 = vmatpush1.bf16.msra.mxu0 %v2245
    %2709 = vmatprep.subr.bf16.mxu0 %v2250
    %2710 = vmatpush1.bf16.msra.mxu0 %v2249
    %2711 = vmatprep.subr.bf16.mxu0 %v2254
    %2712 = vmatpush1.bf16.msra.mxu0 %v2253
    %2713 = vmatprep.subr.bf16.mxu0 %v2258
    %2714 = vmatpush1.bf16.msra.mxu0 %v2257
    %2715 = vmatprep.subr.bf16.mxu0 %v2262
    %2716 = vmatpush1.bf16.msra.mxu0 %v2261
    %2717 = vmatprep.subr.bf16.mxu0 %v2266
    %2718 = vmatpush1.bf16.msra.mxu0 %v2265
    %2719 = vmatprep.subr.bf16.mxu0 %v2270
    %2720 = vmatpush1.bf16.msra.mxu0 %v2269
    %2721 = vmatprep.subr.bf16.mxu0 %v2274
    %2722 = vmatpush1.bf16.msra.mxu0 %v2273
    %2723 = vmatprep.subr.bf16.mxu0 %v2278
    %2724 = vmatpush1.bf16.msra.mxu0 %v2277
    %2725 = vmatprep.subr.bf16.mxu0 %v2282
    %2726 = vmatpush1.bf16.msra.mxu0 %v2281
    %2727 = vmatprep.subr.bf16.mxu0 %v2286
    %2728 = vmatpush1.bf16.msra.mxu0 %v2285
    %2729 = vmatprep.subr.bf16.mxu0 %v2290
    %2730 = vmatpush1.bf16.msra.mxu0 %v2289
    %2731 = vmatprep.subr.bf16.mxu0 %v2294
    %2732 = vmatpush1.bf16.msra.mxu0 %v2293
    %2733 = vmatprep.subr.bf16.mxu0 %v2298
    %2734 = vmatpush1.bf16.msra.mxu0 %v2297
    %2735 = vmatprep.mubr.bf16.mxu0 %v1060
    %2736 = vmatmul.mubr.bf16.gmra.mrb[0].mxu0 %v1059
    %v2737 = vpop.f32.mrb[0].mxu0
    %v2738 = vadd.f32 %v2697, %v2737
    %v2739 = vpop.f32.mrb[0].mxu0
    %v2740 = vadd.f32 %v2699, %v2739
    %v2741 = vpop.f32.mrb[0].mxu0
    %v2742 = vpop.f32.mrb[0].mxu0
    %2743 = vdwg.mxu0
    %2744 = vmatprep.subr.bf16.mxu0 %v2302
    %2745 = vmatpush1.bf16.msra.mxu0 %v2301
    %2746 = vmatprep.subr.bf16.mxu0 %v2306
    %2747 = vmatpush1.bf16.msra.mxu0 %v2305
    %2748 = vmatprep.subr.bf16.mxu0 %v2310
    %2749 = vmatpush1.bf16.msra.mxu0 %v2309
    %2750 = vmatprep.subr.bf16.mxu0 %v2314
    %2751 = vmatpush1.bf16.msra.mxu0 %v2313
    %2752 = vmatprep.subr.bf16.mxu0 %v2318
    %2753 = vmatpush1.bf16.msra.mxu0 %v2317
    %2754 = vmatprep.subr.bf16.mxu0 %v2322
    %2755 = vmatpush1.bf16.msra.mxu0 %v2321
    %2756 = vmatprep.subr.bf16.mxu0 %v2326
    %2757 = vmatpush1.bf16.msra.mxu0 %v2325
    %2758 = vmatprep.subr.bf16.mxu0 %v2330
    %2759 = vmatpush1.bf16.msra.mxu0 %v2329
    %2760 = vmatprep.subr.bf16.mxu0 %v2334
    %2761 = vmatpush1.bf16.msra.mxu0 %v2333
    %2762 = vmatprep.subr.bf16.mxu0 %v2338
    %2763 = vmatpush1.bf16.msra.mxu0 %v2337
    %2764 = vmatprep.subr.bf16.mxu0 %v2342
    %2765 = vmatpush1.bf16.msra.mxu0 %v2341
    %2766 = vmatprep.subr.bf16.mxu0 %v2346
    %2767 = vmatpush1.bf16.msra.mxu0 %v2345
    %2768 = vmatprep.subr.bf16.mxu0 %v2350
    %2769 = vmatpush1.bf16.msra.mxu0 %v2349
    %2770 = vmatprep.subr.bf16.mxu0 %v2354
    %2771 = vmatpush1.bf16.msra.mxu0 %v2353
    %2772 = vmatprep.subr.bf16.mxu0 %v2358
    %2773 = vmatpush1.bf16.msra.mxu0 %v2357
    %2774 = vmatprep.subr.bf16.mxu0 %v2362
    %2775 = vmatpush1.bf16.msra.mxu0 %v2361
    %2776 = vmatprep.mubr.bf16.mxu0 %v1062
    %2777 = vmatmul.mubr.bf16.gmra.mrb[0].mxu0 %v1061
    %v2778 = vpop.f32.mrb[0].mxu0
    %v2779 = vadd.f32 %v2738, %v2778
    %v2780 = vpop.f32.mrb[0].mxu0
    %v2781 = vadd.f32 %v2740, %v2780
    %v2782 = vpop.f32.mrb[0].mxu0
    %v2783 = vpop.f32.mrb[0].mxu0
    %2784 = vdwg.mxu0
    %2785 = vmatprep.subr.bf16.mxu0 %v2112
    %2786 = vmatpush1.bf16.msra.mxu0 %v2111
    %2787 = vmatprep.subr.bf16.mxu0 %v2116
    %2788 = vmatpush1.bf16.msra.mxu0 %v2115
    %2789 = vmatprep.subr.bf16.mxu0 %v2120
    %2790 = vmatpush1.bf16.msra.mxu0 %v2119
    %2791 = vmatprep.subr.bf16.mxu0 %v2124
    %2792 = vmatpush1.bf16.msra.mxu0 %v2123
    %2793 = vmatprep.subr.bf16.mxu0 %v2128
    %2794 = vmatpush1.bf16.msra.mxu0 %v2127
    %2795 = vmatprep.subr.bf16.mxu0 %v2132
    %2796 = vmatpush1.bf16.msra.mxu0 %v2131
    %2797 = vmatprep.subr.bf16.mxu0 %v2136
    %2798 = vmatpush1.bf16.msra.mxu0 %v2135
    %2799 = vmatprep.subr.bf16.mxu0 %v2140
    %2800 = vmatpush1.bf16.msra.mxu0 %v2139
    %2801 = vmatprep.subr.bf16.mxu0 %v2144
    %2802 = vmatpush1.bf16.msra.mxu0 %v2143
    %2803 = vmatprep.subr.bf16.mxu0 %v2148
    %2804 = vmatpush1.bf16.msra.mxu0 %v2147
    %2805 = vmatprep.subr.bf16.mxu0 %v2152
    %2806 = vmatpush1.bf16.msra.mxu0 %v2151
    %2807 = vmatprep.subr.bf16.mxu0 %v2156
    %2808 = vmatpush1.bf16.msra.mxu0 %v2155
    %2809 = vmatprep.subr.bf16.mxu0 %v2160
    %2810 = vmatpush1.bf16.msra.mxu0 %v2159
    %2811 = vmatprep.subr.bf16.mxu0 %v2164
    %2812 = vmatpush1.bf16.msra.mxu0 %v2163
    %2813 = vmatprep.subr.bf16.mxu0 %v2168
    %2814 = vmatpush1.bf16.msra.mxu0 %v2167
    %2815 = vmatprep.subr.bf16.mxu0 %v2172
    %2816 = vmatpush1.bf16.msra.mxu0 %v2171
    %2817 = vmatprep.mubr.bf16.mxu0 %v1056
    %2818 = vmatmul.mubr.bf16.gmra.mrb[0].mxu0 %v1055
    %v2819 = vpop.f32.mrb[0].mxu0
    %v2820 = vadd.f32 %v1332, %v2819
    %v2821 = vpop.f32.mrb[0].mxu0
    %v2822 = vadd.f32 %v1336, %v2821
    %v2823 = vpop.f32.mrb[0].mxu0
    %v2824 = vpop.f32.mrb[0].mxu0
    %2825 = vdwg.mxu0
    %2826 = vmatprep.subr.bf16.mxu0 %v2176
    %2827 = vmatpush1.bf16.msra.mxu0 %v2175
    %2828 = vmatprep.subr.bf16.mxu0 %v2180
    %2829 = vmatpush1.bf16.msra.mxu0 %v2179
    %2830 = vmatprep.subr.bf16.mxu0 %v2184
    %2831 = vmatpush1.bf16.msra.mxu0 %v2183
    %2832 = vmatprep.subr.bf16.mxu0 %v2188
    %2833 = vmatpush1.bf16.msra.mxu0 %v2187
    %2834 = vmatprep.subr.bf16.mxu0 %v2192
    %2835 = vmatpush1.bf16.msra.mxu0 %v2191
    %2836 = vmatprep.subr.bf16.mxu0 %v2196
    %2837 = vmatpush1.bf16.msra.mxu0 %v2195
    %2838 = vmatprep.subr.bf16.mxu0 %v2200
    %2839 = vmatpush1.bf16.msra.mxu0 %v2199
    %2840 = vmatprep.subr.bf16.mxu0 %v2204
    %2841 = vmatpush1.bf16.msra.mxu0 %v2203
    %2842 = vmatprep.subr.bf16.mxu0 %v2208
    %2843 = vmatpush1.bf16.msra.mxu0 %v2207
    %2844 = vmatprep.subr.bf16.mxu0 %v2212
    %2845 = vmatpush1.bf16.msra.mxu0 %v2211
    %2846 = vmatprep.subr.bf16.mxu0 %v2216
    %2847 = vmatpush1.bf16.msra.mxu0 %v2215
    %2848 = vmatprep.subr.bf16.mxu0 %v2220
    %2849 = vmatpush1.bf16.msra.mxu0 %v2219
    %2850 = vmatprep.subr.bf16.mxu0 %v2224
    %2851 = vmatpush1.bf16.msra.mxu0 %v2223
    %2852 = vmatprep.subr.bf16.mxu0 %v2228
    %2853 = vmatpush1.bf16.msra.mxu0 %v2227
    %2854 = vmatprep.subr.bf16.mxu0 %v2232
    %2855 = vmatpush1.bf16.msra.mxu0 %v2231
    %2856 = vmatprep.subr.bf16.mxu0 %v2236
    %2857 = vmatpush1.bf16.msra.mxu0 %v2235
    %2858 = vmatprep.mubr.bf16.mxu0 %v1058
    %2859 = vmatmul.mubr.bf16.gmra.mrb[0].mxu0 %v1057
    %v2860 = vpop.f32.mrb[0].mxu0
    %v2861 = vadd.f32 %v2820, %v2860
    %v2862 = vpop.f32.mrb[0].mxu0
    %v2863 = vadd.f32 %v2822, %v2862
    %v2864 = vpop.f32.mrb[0].mxu0
    %v2865 = vpop.f32.mrb[0].mxu0
    %2866 = vdwg.mxu0
    %2867 = vmatprep.subr.bf16.mxu0 %v2240
    %2868 = vmatpush1.bf16.msra.mxu0 %v2239
    %2869 = vmatprep.subr.bf16.mxu0 %v2244
    %2870 = vmatpush1.bf16.msra.mxu0 %v2243
    %2871 = vmatprep.subr.bf16.mxu0 %v2248
    %2872 = vmatpush1.bf16.msra.mxu0 %v2247
    %2873 = vmatprep.subr.bf16.mxu0 %v2252
    %2874 = vmatpush1.bf16.msra.mxu0 %v2251
    %2875 = vmatprep.subr.bf16.mxu0 %v2256
    %2876 = vmatpush1.bf16.msra.mxu0 %v2255
    %2877 = vmatprep.subr.bf16.mxu0 %v2260
    %2878 = vmatpush1.bf16.msra.mxu0 %v2259
    %2879 = vmatprep.subr.bf16.mxu0 %v2264
    %2880 = vmatpush1.bf16.msra.mxu0 %v2263
    %2881 = vmatprep.subr.bf16.mxu0 %v2268
    %2882 = vmatpush1.bf16.msra.mxu0 %v2267
    %2883 = vmatprep.subr.bf16.mxu0 %v2272
    %2884 = vmatpush1.bf16.msra.mxu0 %v2271
    %2885 = vmatprep.subr.bf16.mxu0 %v2276
    %2886 = vmatpush1.bf16.msra.mxu0 %v2275
    %2887 = vmatprep.subr.bf16.mxu0 %v2280
    %2888 = vmatpush1.bf16.msra.mxu0 %v2279
    %2889 = vmatprep.subr.bf16.mxu0 %v2284
    %2890 = vmatpush1.bf16.msra.mxu0 %v2283
    %2891 = vmatprep.subr.bf16.mxu0 %v2288
    %2892 = vmatpush1.bf16.msra.mxu0 %v2287
    %2893 = vmatprep.subr.bf16.mxu0 %v2292
    %2894 = vmatpush1.bf16.msra.mxu0 %v2291
    %2895 = vmatprep.subr.bf16.mxu0 %v2296
    %2896 = vmatpush1.bf16.msra.mxu0 %v2295
    %2897 = vmatprep.subr.bf16.mxu0 %v2300
    %2898 = vmatpush1.bf16.msra.mxu0 %v2299
    %2899 = vmatprep.mubr.bf16.mxu0 %v1060
    %2900 = vmatmul.mubr.bf16.gmra.mrb[0].mxu0 %v1059
    %v2901 = vpop.f32.mrb[0].mxu0
    %v2902 = vadd.f32 %v2861, %v2901
    %v2903 = vpop.f32.mrb[0].mxu0
    %v2904 = vadd.f32 %v2863, %v2903
    %v2905 = vpop.f32.mrb[0].mxu0
    %v2906 = vpop.f32.mrb[0].mxu0
    %2907 = vdwg.mxu0
    %2908 = vmatprep.subr.bf16.mxu0 %v2304
    %2909 = vmatpush1.bf16.msra.mxu0 %v2303
    %2910 = vmatprep.subr.bf16.mxu0 %v2308
    %2911 = vmatpush1.bf16.msra.mxu0 %v2307
    %2912 = vmatprep.subr.bf16.mxu0 %v2312
    %2913 = vmatpush1.bf16.msra.mxu0 %v2311
    %2914 = vmatprep.subr.bf16.mxu0 %v2316
    %2915 = vmatpush1.bf16.msra.mxu0 %v2315
    %2916 = vmatprep.subr.bf16.mxu0 %v2320
    %2917 = vmatpush1.bf16.msra.mxu0 %v2319
    %2918 = vmatprep.subr.bf16.mxu0 %v2324
    %2919 = vmatpush1.bf16.msra.mxu0 %v2323
    %2920 = vmatprep.subr.bf16.mxu0 %v2328
    %2921 = vmatpush1.bf16.msra.mxu0 %v2327
    %2922 = vmatprep.subr.bf16.mxu0 %v2332
    %2923 = vmatpush1.bf16.msra.mxu0 %v2331
    %2924 = vmatprep.subr.bf16.mxu0 %v2336
    %2925 = vmatpush1.bf16.msra.mxu0 %v2335
    %2926 = vmatprep.subr.bf16.mxu0 %v2340
    %2927 = vmatpush1.bf16.msra.mxu0 %v2339
    %2928 = vmatprep.subr.bf16.mxu0 %v2344
    %2929 = vmatpush1.bf16.msra.mxu0 %v2343
    %2930 = vmatprep.subr.bf16.mxu0 %v2348
    %2931 = vmatpush1.bf16.msra.mxu0 %v2347
    %2932 = vmatprep.subr.bf16.mxu0 %v2352
    %2933 = vmatpush1.bf16.msra.mxu0 %v2351
    %2934 = vmatprep.subr.bf16.mxu0 %v2356
    %2935 = vmatpush1.bf16.msra.mxu0 %v2355
    %2936 = vmatprep.subr.bf16.mxu0 %v2360
    %2937 = vmatpush1.bf16.msra.mxu0 %v2359
    %2938 = vmatprep.subr.bf16.mxu0 %v2364
    %2939 = vmatpush1.bf16.msra.mxu0 %v2363
    %2940 = vmatprep.mubr.bf16.mxu0 %v1062
    %2941 = vmatmul.mubr.bf16.gmra.mrb[0].mxu0 %v1061
    %v2942 = vpop.f32.mrb[0].mxu0
    %v2943 = vadd.f32 %v2902, %v2942
    %v2944 = vpop.f32.mrb[0].mxu0
    %v2945 = vadd.f32 %v2904, %v2944
    %v2946 = vpop.f32.mrb[0].mxu0
    %v2947 = vpop.f32.mrb[0].mxu0
    %2948 = vdwg.mxu0
    %v2949 = vmax.f32 %v2779, 0.0
    %v2950 = vmax.f32 %v2781, 0.0
    %v2951 = vmax.f32 %v2943, 0.0
    %v2952 = vmax.f32 %v2945, 0.0
    %v2953 = vpack.c.bf16 %v2949, %v2949
    %v2954 = vpack.c.bf16 %v2950, %v2950
    %v2955 = vpack.c.bf16 %v2951, %v2951
    %v2956 = vpack.c.bf16 %v2952, %v2952
    %v2957 = vld [vmem:[#allocation7] sm:$0xf]
    %v2958 = vld [vmem:[#allocation7 + $0x4] sm:$0xf]
    %v2959 = vld [vmem:[#allocation7 + $0x8] sm:$0xf]
    %v2960 = vld [vmem:[#allocation7 + $0xc] sm:$0xf]
    %v2961 = vld [vmem:[#allocation7 + $0x10] sm:$0xf]
    %v2962 = vld [vmem:[#allocation7 + $0x14] sm:$0xf]
    %v2963 = vld [vmem:[#allocation7 + $0x18] sm:$0xf]
    %v2964 = vld [vmem:[#allocation7 + $0x1c] sm:$0xf]
    %v2965 = vld [vmem:[#allocation7 + $0x20] sm:$0xf]
    %v2966 = vld [vmem:[#allocation7 + $0x24] sm:$0xf]
    %v2967 = vld [vmem:[#allocation7 + $0x28] sm:$0xf]
    %v2968 = vld [vmem:[#allocation7 + $0x2c] sm:$0xf]
    %v2969 = vld [vmem:[#allocation7 + $0x30] sm:$0xf]
    %v2970 = vld [vmem:[#allocation7 + $0x34] sm:$0xf]
    %v2971 = vld [vmem:[#allocation7 + $0x38] sm:$0xf]
    %v2972 = vld [vmem:[#allocation7 + $0x3c] sm:$0xf]
    %v2973 = vld [vmem:[#allocation7 + $0x40] sm:$0xf]
    %v2974 = vld [vmem:[#allocation7 + $0x44] sm:$0xf]
    %v2975 = vld [vmem:[#allocation7 + $0x48] sm:$0xf]
    %v2976 = vld [vmem:[#allocation7 + $0x4c] sm:$0xf]
    %v2977 = vld [vmem:[#allocation7 + $0x50] sm:$0xf]
    %v2978 = vld [vmem:[#allocation7 + $0x54] sm:$0xf]
    %v2979 = vld [vmem:[#allocation7 + $0x58] sm:$0xf]
    %v2980 = vld [vmem:[#allocation7 + $0x5c] sm:$0xf]
    %v2981 = vld [vmem:[#allocation7 + $0x60] sm:$0xf]
    %v2982 = vld [vmem:[#allocation7 + $0x64] sm:$0xf]
    %v2983 = vld [vmem:[#allocation7 + $0x68] sm:$0xf]
    %v2984 = vld [vmem:[#allocation7 + $0x6c] sm:$0xf]
    %v2985 = vld [vmem:[#allocation7 + $0x70] sm:$0xf]
    %v2986 = vld [vmem:[#allocation7 + $0x74] sm:$0xf]
    %v2987 = vld [vmem:[#allocation7 + $0x78] sm:$0xf]
    %v2988 = vld [vmem:[#allocation7 + $0x7c] sm:$0xf]
    %v2989 = vld [vmem:[#allocation7 + $0x80] sm:$0xf]
    %v2990 = vld [vmem:[#allocation7 + $0x84] sm:$0xf]
    %v2991 = vld [vmem:[#allocation7 + $0x88] sm:$0xf]
    %v2992 = vld [vmem:[#allocation7 + $0x8c] sm:$0xf]
    %v2993 = vld [vmem:[#allocation7 + $0x90] sm:$0xf]
    %v2994 = vld [vmem:[#allocation7 + $0x94] sm:$0xf]
    %v2995 = vld [vmem:[#allocation7 + $0x98] sm:$0xf]
    %v2996 = vld [vmem:[#allocation7 + $0x9c] sm:$0xf]
    %v2997 = vld [vmem:[#allocation7 + $0xa0] sm:$0xf]
    %v2998 = vld [vmem:[#allocation7 + $0xa4] sm:$0xf]
    %v2999 = vld [vmem:[#allocation7 + $0xa8] sm:$0xf]
    %v3000 = vld [vmem:[#allocation7 + $0xac] sm:$0xf]
    %v3001 = vld [vmem:[#allocation7 + $0xb0] sm:$0xf]
    %v3002 = vld [vmem:[#allocation7 + $0xb4] sm:$0xf]
    %v3003 = vld [vmem:[#allocation7 + $0xb8] sm:$0xf]
    %v3004 = vld [vmem:[#allocation7 + $0xbc] sm:$0xf]
    %v3005 = vld [vmem:[#allocation7 + $0xc0] sm:$0xf]
    %v3006 = vld [vmem:[#allocation7 + $0xc4] sm:$0xf]
    %v3007 = vld [vmem:[#allocation7 + $0xc8] sm:$0xf]
    %v3008 = vld [vmem:[#allocation7 + $0xcc] sm:$0xf]
    %v3009 = vld [vmem:[#allocation7 + $0xd0] sm:$0xf]
    %v3010 = vld [vmem:[#allocation7 + $0xd4] sm:$0xf]
    %v3011 = vld [vmem:[#allocation7 + $0xd8] sm:$0xf]
    %v3012 = vld [vmem:[#allocation7 + $0xdc] sm:$0xf]
    %v3013 = vld [vmem:[#allocation7 + $0xe0] sm:$0xf]
    %v3014 = vld [vmem:[#allocation7 + $0xe4] sm:$0xf]
    %v3015 = vld [vmem:[#allocation7 + $0xe8] sm:$0xf]
    %v3016 = vld [vmem:[#allocation7 + $0xec] sm:$0xf]
    %v3017 = vld [vmem:[#allocation7 + $0xf0] sm:$0xf]
    %v3018 = vld [vmem:[#allocation7 + $0xf4] sm:$0xf]
    %v3019 = vld [vmem:[#allocation7 + $0xf8] sm:$0xf]
    %v3020 = vld [vmem:[#allocation7 + $0xfc] sm:$0xf]
    %v3021 = vld [vmem:[%s6] sm:$0x1]
    %v3023 = vlaneseq
    %v3024 = vshrl.u32 %v3023, 7
    %v3025 = vsub.s32 0, %v3024
    %v3026 = vrot.slane %v3021, %v3025
    %v3092 = vunpack.c.l.b16 %v2957
    %v3093 = vunpack.c.l.b16 %v2958
    %v3094 = vunpack.c.l.b16 %v2959
    %v3095 = vunpack.c.l.b16 %v2960
    %v3096 = vunpack.c.l.b16 %v2961
    %v3097 = vunpack.c.l.b16 %v2962
    %v3098 = vunpack.c.l.b16 %v2963
    %v3099 = vunpack.c.l.b16 %v2964
    %v3100 = vunpack.c.l.b16 %v2965
    %v3101 = vunpack.c.l.b16 %v2966
    %v3102 = vunpack.c.l.b16 %v2967
    %v3103 = vunpack.c.l.b16 %v2968
    %v3104 = vunpack.c.l.b16 %v2969
    %v3105 = vunpack.c.l.b16 %v2970
    %v3106 = vunpack.c.l.b16 %v2971
    %v3107 = vunpack.c.l.b16 %v2972
    %v3108 = vunpack.c.l.b16 %v2973
    %v3109 = vunpack.c.l.b16 %v2974
    %v3110 = vunpack.c.l.b16 %v2975
    %v3111 = vunpack.c.l.b16 %v2976
    %v3112 = vunpack.c.l.b16 %v2977
    %v3113 = vunpack.c.l.b16 %v2978
    %v3114 = vunpack.c.l.b16 %v2979
    %v3115 = vunpack.c.l.b16 %v2980
    %v3116 = vunpack.c.l.b16 %v2981
    %v3117 = vunpack.c.l.b16 %v2982
    %v3118 = vunpack.c.l.b16 %v2983
    %v3119 = vunpack.c.l.b16 %v2984
    %v3120 = vunpack.c.l.b16 %v2985
    %v3121 = vunpack.c.l.b16 %v2986
    %v3122 = vunpack.c.l.b16 %v2987
    %v3123 = vunpack.c.l.b16 %v2988
    %v3124 = vunpack.c.l.b16 %v2989
    %v3125 = vunpack.c.l.b16 %v2990
    %v3126 = vunpack.c.l.b16 %v2991
    %v3127 = vunpack.c.l.b16 %v2992
    %v3128 = vunpack.c.l.b16 %v2993
    %v3129 = vunpack.c.l.b16 %v2994
    %v3130 = vunpack.c.l.b16 %v2995
    %v3131 = vunpack.c.l.b16 %v2996
    %v3132 = vunpack.c.l.b16 %v2997
    %v3133 = vunpack.c.l.b16 %v2998
    %v3134 = vunpack.c.l.b16 %v2999
    %v3135 = vunpack.c.l.b16 %v3000
    %v3136 = vunpack.c.l.b16 %v3001
    %v3137 = vunpack.c.l.b16 %v3002
    %v3138 = vunpack.c.l.b16 %v3003
    %v3139 = vunpack.c.l.b16 %v3004
    %v3140 = vunpack.c.l.b16 %v3005
    %v3141 = vunpack.c.l.b16 %v3006
    %v3142 = vunpack.c.l.b16 %v3007
    %v3143 = vunpack.c.l.b16 %v3008
    %v3144 = vunpack.c.l.b16 %v3009
    %v3145 = vunpack.c.l.b16 %v3010
    %v3146 = vunpack.c.l.b16 %v3011
    %v3147 = vunpack.c.l.b16 %v3012
    %v3148 = vunpack.c.l.b16 %v3013
    %v3149 = vunpack.c.l.b16 %v3014
    %v3150 = vunpack.c.l.b16 %v3015
    %v3151 = vunpack.c.l.b16 %v3016
    %v3152 = vunpack.c.l.b16 %v3017
    %v3153 = vunpack.c.l.b16 %v3018
    %v3154 = vunpack.c.l.b16 %v3019
    %v3155 = vunpack.c.l.b16 %v3020
    %v3156 = vpack.c.b16 %v3093, %v3092
    %v3157 = vpack.c.b16 %v3095, %v3094
    %v3158 = vpack.c.b16 %v3097, %v3096
    %v3159 = vpack.c.b16 %v3099, %v3098
    %v3160 = vpack.c.b16 %v3101, %v3100
    %v3161 = vpack.c.b16 %v3103, %v3102
    %v3162 = vpack.c.b16 %v3105, %v3104
    %v3163 = vpack.c.b16 %v3107, %v3106
    %v3164 = vpack.c.b16 %v3109, %v3108
    %v3165 = vpack.c.b16 %v3111, %v3110
    %v3166 = vpack.c.b16 %v3113, %v3112
    %v3167 = vpack.c.b16 %v3115, %v3114
    %v3168 = vpack.c.b16 %v3117, %v3116
    %v3169 = vpack.c.b16 %v3119, %v3118
    %v3170 = vpack.c.b16 %v3121, %v3120
    %v3171 = vpack.c.b16 %v3123, %v3122
    %v3172 = vpack.c.b16 %v3125, %v3124
    %v3173 = vpack.c.b16 %v3127, %v3126
    %v3174 = vpack.c.b16 %v3129, %v3128
    %v3175 = vpack.c.b16 %v3131, %v3130
    %v3176 = vpack.c.b16 %v3133, %v3132
    %v3177 = vpack.c.b16 %v3135, %v3134
    %v3178 = vpack.c.b16 %v3137, %v3136
    %v3179 = vpack.c.b16 %v3139, %v3138
    %v3180 = vpack.c.b16 %v3141, %v3140
    %v3181 = vpack.c.b16 %v3143, %v3142
    %v3182 = vpack.c.b16 %v3145, %v3144
    %v3183 = vpack.c.b16 %v3147, %v3146
    %v3184 = vpack.c.b16 %v3149, %v3148
    %v3185 = vpack.c.b16 %v3151, %v3150
    %v3186 = vpack.c.b16 %v3153, %v3152
    %v3187 = vpack.c.b16 %v3155, %v3154
    %3220 = vmatprep.subr.bf16.mxu0 0
    %3221 = vmatpush1.bf16.msra.mxu0 %v3156
    %3222 = vmatprep.subr.bf16.mxu0 0
    %3223 = vmatpush1.bf16.msra.mxu0 %v3157
    %3224 = vmatprep.subr.bf16.mxu0 0
    %3225 = vmatpush1.bf16.msra.mxu0 %v3158
    %3226 = vmatprep.subr.bf16.mxu0 0
    %3227 = vmatpush1.bf16.msra.mxu0 %v3159
    %3228 = vmatprep.subr.bf16.mxu0 0
    %3229 = vmatpush1.bf16.msra.mxu0 %v3160
    %3230 = vmatprep.subr.bf16.mxu0 0
    %3231 = vmatpush1.bf16.msra.mxu0 %v3161
    %3232 = vmatprep.subr.bf16.mxu0 0
    %3233 = vmatpush1.bf16.msra.mxu0 %v3162
    %3234 = vmatprep.subr.bf16.mxu0 0
    %3235 = vmatpush1.bf16.msra.mxu0 %v3163
    %3236 = vmatprep.subr.bf16.mxu0 0
    %3237 = vmatpush1.bf16.msra.mxu0 %v3164
    %3238 = vmatprep.subr.bf16.mxu0 0
    %3239 = vmatpush1.bf16.msra.mxu0 %v3165
    %3240 = vmatprep.subr.bf16.mxu0 0
    %3241 = vmatpush1.bf16.msra.mxu0 %v3166
    %3242 = vmatprep.subr.bf16.mxu0 0
    %3243 = vmatpush1.bf16.msra.mxu0 %v3167
    %3244 = vmatprep.subr.bf16.mxu0 0
    %3245 = vmatpush1.bf16.msra.mxu0 %v3168
    %3246 = vmatprep.subr.bf16.mxu0 0
    %3247 = vmatpush1.bf16.msra.mxu0 %v3169
    %3248 = vmatprep.subr.bf16.mxu0 0
    %3249 = vmatpush1.bf16.msra.mxu0 %v3170
    %3250 = vmatprep.subr.bf16.mxu0 0
    %3251 = vmatpush1.bf16.msra.mxu0 %v3171
    %3252 = vmatprep.mubr.bf16.mxu0 %v2954
    %3253 = vmatmul.mubr.bf16.gmra.mrb[0].mxu0 %v2953
    %v3254 = vpop.f32.mrb[0].mxu0
    %v3255 = vadd.f32 %v3026, %v3254
    %v3256 = vpop.f32.mrb[0].mxu0
    %v3257 = vpop.f32.mrb[0].mxu0
    %v3258 = vpop.f32.mrb[0].mxu0
    %3259 = vdwg.mxu0
    %3260 = vmatprep.subr.bf16.mxu0 0
    %3261 = vmatpush1.bf16.msra.mxu0 %v3172
    %3262 = vmatprep.subr.bf16.mxu0 0
    %3263 = vmatpush1.bf16.msra.mxu0 %v3173
    %3264 = vmatprep.subr.bf16.mxu0 0
    %3265 = vmatpush1.bf16.msra.mxu0 %v3174
    %3266 = vmatprep.subr.bf16.mxu0 0
    %3267 = vmatpush1.bf16.msra.mxu0 %v3175
    %3268 = vmatprep.subr.bf16.mxu0 0
    %3269 = vmatpush1.bf16.msra.mxu0 %v3176
    %3270 = vmatprep.subr.bf16.mxu0 0
    %3271 = vmatpush1.bf16.msra.mxu0 %v3177
    %3272 = vmatprep.subr.bf16.mxu0 0
    %3273 = vmatpush1.bf16.msra.mxu0 %v3178
    %3274 = vmatprep.subr.bf16.mxu0 0
    %3275 = vmatpush1.bf16.msra.mxu0 %v3179
    %3276 = vmatprep.subr.bf16.mxu0 0
    %3277 = vmatpush1.bf16.msra.mxu0 %v3180
    %3278 = vmatprep.subr.bf16.mxu0 0
    %3279 = vmatpush1.bf16.msra.mxu0 %v3181
    %3280 = vmatprep.subr.bf16.mxu0 0
    %3281 = vmatpush1.bf16.msra.mxu0 %v3182
    %3282 = vmatprep.subr.bf16.mxu0 0
    %3283 = vmatpush1.bf16.msra.mxu0 %v3183
    %3284 = vmatprep.subr.bf16.mxu0 0
    %3285 = vmatpush1.bf16.msra.mxu0 %v3184
    %3286 = vmatprep.subr.bf16.mxu0 0
    %3287 = vmatpush1.bf16.msra.mxu0 %v3185
    %3288 = vmatprep.subr.bf16.mxu0 0
    %3289 = vmatpush1.bf16.msra.mxu0 %v3186
    %3290 = vmatprep.subr.bf16.mxu0 0
    %3291 = vmatpush1.bf16.msra.mxu0 %v3187
    %3292 = vmatprep.mubr.bf16.mxu0 %v2956
    %3293 = vmatmul.mubr.bf16.gmra.mrb[0].mxu0 %v2955
    %v3294 = vpop.f32.mrb[0].mxu0
    %v3295 = vadd.f32 %v3255, %v3294
    %v3296 = vpop.f32.mrb[0].mxu0
    %v3297 = vpop.f32.mrb[0].mxu0
    %v3298 = vpop.f32.mrb[0].mxu0
    %3299 = vdwg.mxu0
    %v3300 = vxor.u32 %v3295, 2147483648
    %v3301 = vmul.f32 %v3300, 1.442695
    %v3302 = vpow.pop %v3301
    %v3303 = vadd.f32 %v3302, 1.0
    %v3304 = vrcp.pop %v3303
    %v3305 = vmul.f32 1.0, %v3304
    %3306 = vst [vmem:[#allocation8] sm:$0xff] %v3305
    // Predicated region
    $region42: #{dense_decoder.1} parent=1 // pred_check
      _
    $region43: #{dense_decoder.1} parent=1 // pred_check_branch
      %3308 = sbr.rel (0) target = $region45
    $region44: #{dense_decoder.1} parent=1 // pred_region
      %s3310 = ssub.s32 128, 128
      %3311 = vsyncadd [#allocation4], %s3310
      %s3313 = sshll.u32 [#allocation8], 4
      %s3314 = int_to_ptr.vmem [resolvable:$true] %s3313
      %3316 = dma.vmem_to_hbm [thread:$0]  %s3314, 128, %s7, [#allocation4]
    $region45: #{dense_decoder.1} parent=1 // pred_fallthru
      _
    // Predicated region
    $region46: #{dense_decoder.1} parent=1 // pred_check
      _
    $region47: #{dense_decoder.1} parent=1 // pred_check_branch
      %3318 = sbr.rel (0) target = $region49
    $region48: #{dense_decoder.1} parent=1 // pred_region
      %3319 = dma.done [#allocation4], 128
    $region49: #{dense_decoder.1} parent=1 // pred_fallthru
      _
    %3320 = vsyncpa [#allocation3], 1
    %3321 = vsyncpa [#allocation6], 1
    %3322 = vsyncpa [#allocation4], 1

</llo_original>
